<compile_context>
chip_gen: v7x
topology: tpu7x:2x2x1
jax: 0.10.0
libtpu: 0.0.40
codegen_flags: <defaults>
</compile_context>

<pallas_src>
import jax
import jax.numpy as jnp
import numpy as np
from jax.experimental import pallas as pl
from jax.experimental.pallas import tpu as pltpu


# ----------------------------------------------------------------------------
# Pallas kernel
# ----------------------------------------------------------------------------
def _make_kernel(B, E, Npad):
    """Kernel factory closing over the (static) problem sizes."""

    def kernel(corners_ref, pts_ref, grp_ref, dist_ref, cont_ref):
        # corners_ref: (2, E, Npad)  -- boxes on lanes, E on sublanes, both corners.
        # pts_ref:     (E, B)
        # grp_ref:     (Npad, Npad)  -- constant 0/1 window->frame grouping matrix.
        # dist_ref:    (2, B, Npad) f32  [0]=inner distance, [1]=outer distance
        # cont_ref:    (2, B, Npad) i32  [0]=box containment, [1]=house containment
        c0 = corners_ref[0]                      # (E, Npad)
        c1 = corners_ref[1]
        lo = jnp.minimum(c0, c1)
        hi = jnp.maximum(c0, c1)
        m = 0.1 * (hi - lo)                      # per-box constant, hoisted
        lo_out = lo + m                          # outer-distance corners
        hi_out = hi - m
        hi_in = hi + m                           # inner-distance corners
        lo_in = lo - m

        cont_rows, inner_rows, outer_rows = [], [], []
        for b in range(B):                       # B small & static -> fully unrolled
            # ONE lane broadcast per batch element, shared by all consumers below.
            p = jnp.broadcast_to(pts_ref[:, b:b + 1], (E, Npad))
            mask = jnp.logical_and(lo <= p, p <= hi).astype(jnp.float32)
            cont_rows.append(jnp.min(mask, axis=0, keepdims=True))          # (1,Npad)
            t_o = jnp.maximum(lo_out - p, 0.0) + jnp.maximum(p - hi_out, 0.0)
            outer_rows.append(jnp.sqrt(jnp.sum(t_o * t_o, axis=0, keepdims=True)))
            t_i = jnp.minimum(jnp.maximum(hi_in - p, 0.0),
                              jnp.maximum(p - lo_in, 0.0))
            inner_rows.append(jnp.sqrt(jnp.sum(t_i * t_i, axis=0, keepdims=True)))

        cont = jnp.concatenate(cont_rows, axis=0)     # (B, Npad) 0/1 in f32
        inner = jnp.concatenate(inner_rows, axis=0)   # (B, Npad)
        outer = jnp.concatenate(outer_rows, axis=0)   # (B, Npad)

        # Full-block, 128-lane-wide (unmasked) stores -- 2 per output slab.
        dist_ref[0] = inner
        dist_ref[1] = outer

        # house = frame_in * (1 - any_w window_in); the grouped any-over-W reduction
        # is a single 0/1 grouping matmul on the otherwise-idle MXU.  grp only has
        # ones in rows [NF, NF+NW) x cols [0, NF), so for window/pad lanes the
        # result reduces to `cont`, which the wrapper slices away.
        n_hit = jnp.dot(cont, grp_ref[...], preferred_element_type=jnp.float32)
        house = cont * (1.0 - jnp.minimum(n_hit, 1.0))     # min(n,1) == max over W for 0/1
        cont_ref[0] = cont.astype(jnp.int32)
        cont_ref[1] = house.astype(jnp.int32)

    return kernel


# ----------------------------------------------------------------------------
# Wrapper: layout-only preprocessing, single pallas_call, free slices/reshapes.
# ----------------------------------------------------------------------------
def geometry_net_forward(points, town_frame, town_windows, p=2):
    if p != 2:
        raise NotImplementedError("Pallas kernel specializes the p=2 norm")

    B, E = points.shape
    C, H = town_frame.shape[0], town_frame.shape[1]
    W = town_windows.shape[2]
    NF = C * H                 # frame boxes
    NW = NF * W                # window boxes
    N = NF + NW
    Npad = ((N + 127) // 128) * 128   # pad the lane axis to a full 128-lane tile

    f32, i32 = jnp.float32, jnp.int32

    # Layout-only preprocessing (tiny): boxes onto lanes, E onto sublanes, both
    # corners kept so min/max happens in-kernel.  Box order matches the PyTorch
    # flatten order, so the kernel's flat stores slice/reshape back for free.
    fcorners = jnp.transpose(town_frame.reshape(NF, 2, E), (1, 2, 0)).astype(f32)    # (2,E,NF)
    wcorners = jnp.transpose(town_windows.reshape(NW, 2, E), (1, 2, 0)).astype(f32)  # (2,E,NW)
    corners = jnp.concatenate(
        [fcorners, wcorners, jnp.zeros((2, E, Npad - N), f32)], axis=-1)              # (2,E,Npad)
    pts_t = points.T.astype(f32)                                                      # (E,B)

    # Host-built constant grouping matrix: window lane (NF + f*W + w) -> frame lane f.
    grp_np = np.zeros((Npad, Npad), np.float32)
    for f in range(NF):
        grp_np[NF + f * W: NF + (f + 1) * W, f] = 1.0
    grp = jnp.asarray(grp_np)

    vmem = pl.BlockSpec(memory_space=pltpu.MemorySpace.VMEM)
    dist, cont = pl.pallas_call(
        _make_kernel(B, E, Npad),
        out_shape=(jax.ShapeDtypeStruct((2, B, Npad), f32),   # [inner, outer]
                   jax.ShapeDtypeStruct((2, B, Npad), i32)),  # [containment, house]
        in_specs=[vmem, vmem, vmem],
        out_specs=(vmem, vmem),
    )(corners, pts_t, grp)

    inner_all, outer_all = dist[0], dist[1]
    cont_all, house_all = cont[0], cont[1]

    house = house_all[:, :NF].reshape(B, C, H)
    return dict(
        embeddings=points,
        frame_containment=cont_all[:, :NF].reshape(B, C, H),
        window_containment=cont_all[:, NF:N].reshape(B, C, H, W),
        house_containment=house,
        containment=jnp.max(house, axis=-1),                 # (B, C): trivial glue op
        inner_frame_distance=inner_all[:, :NF].reshape(B, C, H),
        outer_frame_distance=outer_all[:, :NF].reshape(B, C, H),
        inner_window_distances=inner_all[:, NF:N].reshape(B, C, H, W),
        outer_window_distances=outer_all[:, NF:N].reshape(B, C, H, W),
    )


# ----------------------------------------------------------------------------
# Pure-JAX reference (mirrors the PyTorch forward exactly)
# ----------------------------------------------------------------------------
def geometry_net_reference(points, town_frame, town_windows, p=2):
    points_2 = points[:, None, None, :]                      # (B,1,1,E)
    min_frame = jnp.min(town_frame, axis=-2)[None]           # (1,C,H,E)
    max_frame = jnp.max(town_frame, axis=-2)[None]
    min_windows = jnp.min(town_windows, axis=-2)[None]       # (1,C,H,W,E)
    max_windows = jnp.max(town_windows, axis=-2)[None]

    def _inside(l, r, pt):
        return jnp.prod(((l <= pt) & (pt <= r)).astype(jnp.int32), axis=-1)

    def _norm(x):
        return jnp.sum(jnp.abs(x) ** p, axis=-1) ** (1.0 / p)

    def _outer(lo, hi, pt):
        m = 0.1 * (hi - lo)
        return _norm(jnp.maximum(lo + m - pt, 0.0) + jnp.maximum(pt - hi + m, 0.0))

    def _inner(lo, hi, pt):
        m = 0.1 * (hi - lo)
        return _norm(jnp.minimum(jnp.maximum(hi + m - pt, 0.0),
                                 jnp.maximum(pt - lo + m, 0.0)))

    frame_containment = _inside(min_frame, max_frame, points_2)
    inner_frame = _inner(min_frame, max_frame, points_2)
    outer_frame = _outer(min_frame, max_frame, points_2)
    points_3 = points_2[..., None, :]                        # (B,1,1,1,E)
    window_containment = _inside(min_windows, max_windows, points_3)
    inner_window = _inner(min_windows, max_windows, points_3)
    outer_window = _outer(min_windows, max_windows, points_3)
    house_containment = frame_containment * (1 - jnp.max(window_containment, axis=-1))
    containment = jnp.max(house_containment, axis=-1)
    return dict(
        embeddings=points,
        frame_containment=frame_containment,
        window_containment=window_containment,
        house_containment=house_containment,
        containment=containment,
        inner_frame_distance=inner_frame,
        outer_frame_distance=outer_frame,
        inner_window_distances=inner_window,
        outer_window_distances=outer_window,
    )


# ----------------------------------------------------------------------------
if __name__ == "__main__":
    key = jax.random.PRNGKey(0)
    k1, k2, k3 = jax.random.split(key, 3)

    B, E = 8, 32            # batch, embedding_dimensions
    C, H, W = 4, 5, 4       # num_classes, houses/class, windows/house (module defaults)

    # Deterministic synthetic parameters: 3 - 6*U(0,1), as in __init__.
    town_frame = 3.0 - 6.0 * jax.random.uniform(k1, (C, H, 2, E), dtype=jnp.float32)
    town_windows = 3.0 - 6.0 * jax.random.uniform(k2, (C, H, W, 2, E), dtype=jnp.float32)
    points = jax.random.normal(k3, (B, E), dtype=jnp.float32)

    out = jax.jit(geometry_net_forward)(points, town_frame, town_windows)
    jax.block_until_ready(out)

    ref = geometry_net_reference(points, town_frame, town_windows)

    int_keys = ("frame_containment", "window_containment",
                "house_containment", "containment")
    for k in ref:
        got, exp = np.asarray(out[k]), np.asarray(ref[k])
        assert got.shape == exp.shape, (k, got.shape, exp.shape)
        if k in int_keys:
            assert np.array_equal(got, exp), f"mismatch in {k}"
        else:
            assert np.allclose(got, exp, rtol=1e-4, atol=1e-4), f"mismatch in {k}"

    # TODO(synk): get_patches()/render() use shapely geometry (host-side, non-tensor)
    # and have no Pallas equivalent.
    print("KERNEL_OK")
</pallas_src>

<mosaic_0001>
module attributes {stable_mosaic.version = 11 : i64} {
  func.func @kernel(%arg0: memref<2x32x128xf32, #tpu.memory_space<vmem>>, %arg1: memref<32x8xf32, #tpu.memory_space<vmem>>, %arg2: memref<128x128xf32, #tpu.memory_space<vmem>>, %arg3: memref<2x8x128xf32, #tpu.memory_space<vmem>>, %arg4: memref<2x8x128xi32, #tpu.memory_space<vmem>>) attributes {dimension_semantics = [], scalar_prefetch = 0 : i64, scratch_operands = 0 : i64, tpu.core_type = #tpu.core_type<tc>} {
    %c0 = arith.constant 0 : index
    %c0_0 = arith.constant 0 : index
    %c0_1 = arith.constant 0 : index
    %0 = vector.load %arg0[%c0, %c0_0, %c0_1] : memref<2x32x128xf32, #tpu.memory_space<vmem>>, vector<1x32x128xf32>
    %1 = vector.shape_cast %0 : vector<1x32x128xf32> to vector<32x128xf32>
    %c1 = arith.constant 1 : index
    %c0_2 = arith.constant 0 : index
    %c0_3 = arith.constant 0 : index
    %2 = vector.load %arg0[%c1, %c0_2, %c0_3] : memref<2x32x128xf32, #tpu.memory_space<vmem>>, vector<1x32x128xf32>
    %3 = vector.shape_cast %2 : vector<1x32x128xf32> to vector<32x128xf32>
    %4 = arith.minimumf %1, %3 : vector<32x128xf32>
    %5 = arith.maximumf %1, %3 : vector<32x128xf32>
    %6 = arith.subf %5, %4 : vector<32x128xf32>
    %cst = arith.constant 1.000000e-01 : f32
    %7 = vector.broadcast %cst : f32 to vector<32x128xf32>
    %8 = arith.mulf %7, %6 : vector<32x128xf32>
    %9 = arith.addf %4, %8 : vector<32x128xf32>
    %10 = arith.subf %5, %8 : vector<32x128xf32>
    %11 = arith.addf %5, %8 : vector<32x128xf32>
    %12 = arith.subf %4, %8 : vector<32x128xf32>
    %c0_4 = arith.constant 0 : index
    %c0_5 = arith.constant 0 : index
    %13 = vector.load %arg1[%c0_4, %c0_5] : memref<32x8xf32, #tpu.memory_space<vmem>>, vector<32x1xf32>
    %14 = vector.shape_cast %13 : vector<32x1xf32> to vector<32x1xf32>
    %15 = vector.broadcast %14 : vector<32x1xf32> to vector<32x128xf32>
    %16 = arith.cmpf ole, %4, %15 : vector<32x128xf32>
    %17 = arith.cmpf ole, %15, %5 : vector<32x128xf32>
    %18 = arith.andi %16, %17 : vector<32x128xi1>
    %19 = arith.extui %18 : vector<32x128xi1> to vector<32x128xi32>
    %20 = arith.sitofp %19 : vector<32x128xi32> to vector<32x128xf32>
    %cst_6 = arith.constant dense<0x7F800000> : vector<128xf32>
    %21 = vector.multi_reduction <minimumf>, %20, %cst_6 [0] : vector<32x128xf32> to vector<128xf32>
    %22 = vector.shape_cast %21 : vector<128xf32> to vector<1x128xf32>
    %23 = arith.subf %9, %15 : vector<32x128xf32>
    %cst_7 = arith.constant 0.000000e+00 : f32
    %24 = vector.broadcast %cst_7 : f32 to vector<32x128xf32>
    %25 = arith.maximumf %23, %24 : vector<32x128xf32>
    %26 = arith.subf %15, %10 : vector<32x128xf32>
    %cst_8 = arith.constant 0.000000e+00 : f32
    %27 = vector.broadcast %cst_8 : f32 to vector<32x128xf32>
    %28 = arith.maximumf %26, %27 : vector<32x128xf32>
    %29 = arith.addf %25, %28 : vector<32x128xf32>
    %30 = arith.mulf %29, %29 : vector<32x128xf32>
    %cst_9 = arith.constant dense<0.000000e+00> : vector<128xf32>
    %31 = vector.multi_reduction <add>, %30, %cst_9 [0] : vector<32x128xf32> to vector<128xf32>
    %32 = vector.shape_cast %31 : vector<128xf32> to vector<1x128xf32>
    %33 = math.sqrt %32 : vector<1x128xf32>
    %34 = arith.subf %11, %15 : vector<32x128xf32>
    %cst_10 = arith.constant 0.000000e+00 : f32
    %35 = vector.broadcast %cst_10 : f32 to vector<32x128xf32>
    %36 = arith.maximumf %34, %35 : vector<32x128xf32>
    %37 = arith.subf %15, %12 : vector<32x128xf32>
    %cst_11 = arith.constant 0.000000e+00 : f32
    %38 = vector.broadcast %cst_11 : f32 to vector<32x128xf32>
    %39 = arith.maximumf %37, %38 : vector<32x128xf32>
    %40 = arith.minimumf %36, %39 : vector<32x128xf32>
    %41 = arith.mulf %40, %40 : vector<32x128xf32>
    %cst_12 = arith.constant dense<0.000000e+00> : vector<128xf32>
    %42 = vector.multi_reduction <add>, %41, %cst_12 [0] : vector<32x128xf32> to vector<128xf32>
    %43 = vector.shape_cast %42 : vector<128xf32> to vector<1x128xf32>
    %44 = math.sqrt %43 : vector<1x128xf32>
    %c0_13 = arith.constant 0 : index
    %c1_14 = arith.constant 1 : index
    %45 = vector.load %arg1[%c0_13, %c1_14] : memref<32x8xf32, #tpu.memory_space<vmem>>, vector<32x1xf32>
    %46 = vector.shape_cast %45 : vector<32x1xf32> to vector<32x1xf32>
    %47 = vector.broadcast %46 : vector<32x1xf32> to vector<32x128xf32>
    %48 = arith.cmpf ole, %4, %47 : vector<32x128xf32>
    %49 = arith.cmpf ole, %47, %5 : vector<32x128xf32>
    %50 = arith.andi %48, %49 : vector<32x128xi1>
    %51 = arith.extui %50 : vector<32x128xi1> to vector<32x128xi32>
    %52 = arith.sitofp %51 : vector<32x128xi32> to vector<32x128xf32>
    %cst_15 = arith.constant dense<0x7F800000> : vector<128xf32>
    %53 = vector.multi_reduction <minimumf>, %52, %cst_15 [0] : vector<32x128xf32> to vector<128xf32>
    %54 = vector.shape_cast %53 : vector<128xf32> to vector<1x128xf32>
    %55 = arith.subf %9, %47 : vector<32x128xf32>
    %cst_16 = arith.constant 0.000000e+00 : f32
    %56 = vector.broadcast %cst_16 : f32 to vector<32x128xf32>
    %57 = arith.maximumf %55, %56 : vector<32x128xf32>
    %58 = arith.subf %47, %10 : vector<32x128xf32>
    %cst_17 = arith.constant 0.000000e+00 : f32
    %59 = vector.broadcast %cst_17 : f32 to vector<32x128xf32>
    %60 = arith.maximumf %58, %59 : vector<32x128xf32>
    %61 = arith.addf %57, %60 : vector<32x128xf32>
    %62 = arith.mulf %61, %61 : vector<32x128xf32>
    %cst_18 = arith.constant dense<0.000000e+00> : vector<128xf32>
    %63 = vector.multi_reduction <add>, %62, %cst_18 [0] : vector<32x128xf32> to vector<128xf32>
    %64 = vector.shape_cast %63 : vector<128xf32> to vector<1x128xf32>
    %65 = math.sqrt %64 : vector<1x128xf32>
    %66 = arith.subf %11, %47 : vector<32x128xf32>
    %cst_19 = arith.constant 0.000000e+00 : f32
    %67 = vector.broadcast %cst_19 : f32 to vector<32x128xf32>
    %68 = arith.maximumf %66, %67 : vector<32x128xf32>
    %69 = arith.subf %47, %12 : vector<32x128xf32>
    %cst_20 = arith.constant 0.000000e+00 : f32
    %70 = vector.broadcast %cst_20 : f32 to vector<32x128xf32>
    %71 = arith.maximumf %69, %70 : vector<32x128xf32>
    %72 = arith.minimumf %68, %71 : vector<32x128xf32>
    %73 = arith.mulf %72, %72 : vector<32x128xf32>
    %cst_21 = arith.constant dense<0.000000e+00> : vector<128xf32>
    %74 = vector.multi_reduction <add>, %73, %cst_21 [0] : vector<32x128xf32> to vector<128xf32>
    %75 = vector.shape_cast %74 : vector<128xf32> to vector<1x128xf32>
    %76 = math.sqrt %75 : vector<1x128xf32>
    %c0_22 = arith.constant 0 : index
    %c2 = arith.constant 2 : index
    %77 = vector.load %arg1[%c0_22, %c2] : memref<32x8xf32, #tpu.memory_space<vmem>>, vector<32x1xf32>
    %78 = vector.shape_cast %77 : vector<32x1xf32> to vector<32x1xf32>
    %79 = vector.broadcast %78 : vector<32x1xf32> to vector<32x128xf32>
    %80 = arith.cmpf ole, %4, %79 : vector<32x128xf32>
    %81 = arith.cmpf ole, %79, %5 : vector<32x128xf32>
    %82 = arith.andi %80, %81 : vector<32x128xi1>
    %83 = arith.extui %82 : vector<32x128xi1> to vector<32x128xi32>
    %84 = arith.sitofp %83 : vector<32x128xi32> to vector<32x128xf32>
    %cst_23 = arith.constant dense<0x7F800000> : vector<128xf32>
    %85 = vector.multi_reduction <minimumf>, %84, %cst_23 [0] : vector<32x128xf32> to vector<128xf32>
    %86 = vector.shape_cast %85 : vector<128xf32> to vector<1x128xf32>
    %87 = arith.subf %9, %79 : vector<32x128xf32>
    %cst_24 = arith.constant 0.000000e+00 : f32
    %88 = vector.broadcast %cst_24 : f32 to vector<32x128xf32>
    %89 = arith.maximumf %87, %88 : vector<32x128xf32>
    %90 = arith.subf %79, %10 : vector<32x128xf32>
    %cst_25 = arith.constant 0.000000e+00 : f32
    %91 = vector.broadcast %cst_25 : f32 to vector<32x128xf32>
    %92 = arith.maximumf %90, %91 : vector<32x128xf32>
    %93 = arith.addf %89, %92 : vector<32x128xf32>
    %94 = arith.mulf %93, %93 : vector<32x128xf32>
    %cst_26 = arith.constant dense<0.000000e+00> : vector<128xf32>
    %95 = vector.multi_reduction <add>, %94, %cst_26 [0] : vector<32x128xf32> to vector<128xf32>
    %96 = vector.shape_cast %95 : vector<128xf32> to vector<1x128xf32>
    %97 = math.sqrt %96 : vector<1x128xf32>
    %98 = arith.subf %11, %79 : vector<32x128xf32>
    %cst_27 = arith.constant 0.000000e+00 : f32
    %99 = vector.broadcast %cst_27 : f32 to vector<32x128xf32>
    %100 = arith.maximumf %98, %99 : vector<32x128xf32>
    %101 = arith.subf %79, %12 : vector<32x128xf32>
    %cst_28 = arith.constant 0.000000e+00 : f32
    %102 = vector.broadcast %cst_28 : f32 to vector<32x128xf32>
    %103 = arith.maximumf %101, %102 : vector<32x128xf32>
    %104 = arith.minimumf %100, %103 : vector<32x128xf32>
    %105 = arith.mulf %104, %104 : vector<32x128xf32>
    %cst_29 = arith.constant dense<0.000000e+00> : vector<128xf32>
    %106 = vector.multi_reduction <add>, %105, %cst_29 [0] : vector<32x128xf32> to vector<128xf32>
    %107 = vector.shape_cast %106 : vector<128xf32> to vector<1x128xf32>
    %108 = math.sqrt %107 : vector<1x128xf32>
    %c0_30 = arith.constant 0 : index
    %c3 = arith.constant 3 : index
    %109 = vector.load %arg1[%c0_30, %c3] : memref<32x8xf32, #tpu.memory_space<vmem>>, vector<32x1xf32>
    %110 = vector.shape_cast %109 : vector<32x1xf32> to vector<32x1xf32>
    %111 = vector.broadcast %110 : vector<32x1xf32> to vector<32x128xf32>
    %112 = arith.cmpf ole, %4, %111 : vector<32x128xf32>
    %113 = arith.cmpf ole, %111, %5 : vector<32x128xf32>
    %114 = arith.andi %112, %113 : vector<32x128xi1>
    %115 = arith.extui %114 : vector<32x128xi1> to vector<32x128xi32>
    %116 = arith.sitofp %115 : vector<32x128xi32> to vector<32x128xf32>
    %cst_31 = arith.constant dense<0x7F800000> : vector<128xf32>
    %117 = vector.multi_reduction <minimumf>, %116, %cst_31 [0] : vector<32x128xf32> to vector<128xf32>
    %118 = vector.shape_cast %117 : vector<128xf32> to vector<1x128xf32>
    %119 = arith.subf %9, %111 : vector<32x128xf32>
    %cst_32 = arith.constant 0.000000e+00 : f32
    %120 = vector.broadcast %cst_32 : f32 to vector<32x128xf32>
    %121 = arith.maximumf %119, %120 : vector<32x128xf32>
    %122 = arith.subf %111, %10 : vector<32x128xf32>
    %cst_33 = arith.constant 0.000000e+00 : f32
    %123 = vector.broadcast %cst_33 : f32 to vector<32x128xf32>
    %124 = arith.maximumf %122, %123 : vector<32x128xf32>
    %125 = arith.addf %121, %124 : vector<32x128xf32>
    %126 = arith.mulf %125, %125 : vector<32x128xf32>
    %cst_34 = arith.constant dense<0.000000e+00> : vector<128xf32>
    %127 = vector.multi_reduction <add>, %126, %cst_34 [0] : vector<32x128xf32> to vector<128xf32>
    %128 = vector.shape_cast %127 : vector<128xf32> to vector<1x128xf32>
    %129 = math.sqrt %128 : vector<1x128xf32>
    %130 = arith.subf %11, %111 : vector<32x128xf32>
    %cst_35 = arith.constant 0.000000e+00 : f32
    %131 = vector.broadcast %cst_35 : f32 to vector<32x128xf32>
    %132 = arith.maximumf %130, %131 : vector<32x128xf32>
    %133 = arith.subf %111, %12 : vector<32x128xf32>
    %cst_36 = arith.constant 0.000000e+00 : f32
    %134 = vector.broadcast %cst_36 : f32 to vector<32x128xf32>
    %135 = arith.maximumf %133, %134 : vector<32x128xf32>
    %136 = arith.minimumf %132, %135 : vector<32x128xf32>
    %137 = arith.mulf %136, %136 : vector<32x128xf32>
    %cst_37 = arith.constant dense<0.000000e+00> : vector<128xf32>
    %138 = vector.multi_reduction <add>, %137, %cst_37 [0] : vector<32x128xf32> to vector<128xf32>
    %139 = vector.shape_cast %138 : vector<128xf32> to vector<1x128xf32>
    %140 = math.sqrt %139 : vector<1x128xf32>
    %c0_38 = arith.constant 0 : index
    %c4 = arith.constant 4 : index
    %141 = vector.load %arg1[%c0_38, %c4] : memref<32x8xf32, #tpu.memory_space<vmem>>, vector<32x1xf32>
    %142 = vector.shape_cast %141 : vector<32x1xf32> to vector<32x1xf32>
    %143 = vector.broadcast %142 : vector<32x1xf32> to vector<32x128xf32>
    %144 = arith.cmpf ole, %4, %143 : vector<32x128xf32>
    %145 = arith.cmpf ole, %143, %5 : vector<32x128xf32>
    %146 = arith.andi %144, %145 : vector<32x128xi1>
    %147 = arith.extui %146 : vector<32x128xi1> to vector<32x128xi32>
    %148 = arith.sitofp %147 : vector<32x128xi32> to vector<32x128xf32>
    %cst_39 = arith.constant dense<0x7F800000> : vector<128xf32>
    %149 = vector.multi_reduction <minimumf>, %148, %cst_39 [0] : vector<32x128xf32> to vector<128xf32>
    %150 = vector.shape_cast %149 : vector<128xf32> to vector<1x128xf32>
    %151 = arith.subf %9, %143 : vector<32x128xf32>
    %cst_40 = arith.constant 0.000000e+00 : f32
    %152 = vector.broadcast %cst_40 : f32 to vector<32x128xf32>
    %153 = arith.maximumf %151, %152 : vector<32x128xf32>
    %154 = arith.subf %143, %10 : vector<32x128xf32>
    %cst_41 = arith.constant 0.000000e+00 : f32
    %155 = vector.broadcast %cst_41 : f32 to vector<32x128xf32>
    %156 = arith.maximumf %154, %155 : vector<32x128xf32>
    %157 = arith.addf %153, %156 : vector<32x128xf32>
    %158 = arith.mulf %157, %157 : vector<32x128xf32>
    %cst_42 = arith.constant dense<0.000000e+00> : vector<128xf32>
    %159 = vector.multi_reduction <add>, %158, %cst_42 [0] : vector<32x128xf32> to vector<128xf32>
    %160 = vector.shape_cast %159 : vector<128xf32> to vector<1x128xf32>
    %161 = math.sqrt %160 : vector<1x128xf32>
    %162 = arith.subf %11, %143 : vector<32x128xf32>
    %cst_43 = arith.constant 0.000000e+00 : f32
    %163 = vector.broadcast %cst_43 : f32 to vector<32x128xf32>
    %164 = arith.maximumf %162, %163 : vector<32x128xf32>
    %165 = arith.subf %143, %12 : vector<32x128xf32>
    %cst_44 = arith.constant 0.000000e+00 : f32
    %166 = vector.broadcast %cst_44 : f32 to vector<32x128xf32>
    %167 = arith.maximumf %165, %166 : vector<32x128xf32>
    %168 = arith.minimumf %164, %167 : vector<32x128xf32>
    %169 = arith.mulf %168, %168 : vector<32x128xf32>
    %cst_45 = arith.constant dense<0.000000e+00> : vector<128xf32>
    %170 = vector.multi_reduction <add>, %169, %cst_45 [0] : vector<32x128xf32> to vector<128xf32>
    %171 = vector.shape_cast %170 : vector<128xf32> to vector<1x128xf32>
    %172 = math.sqrt %171 : vector<1x128xf32>
    %c0_46 = arith.constant 0 : index
    %c5 = arith.constant 5 : index
    %173 = vector.load %arg1[%c0_46, %c5] : memref<32x8xf32, #tpu.memory_space<vmem>>, vector<32x1xf32>
    %174 = vector.shape_cast %173 : vector<32x1xf32> to vector<32x1xf32>
    %175 = vector.broadcast %174 : vector<32x1xf32> to vector<32x128xf32>
    %176 = arith.cmpf ole, %4, %175 : vector<32x128xf32>
    %177 = arith.cmpf ole, %175, %5 : vector<32x128xf32>
    %178 = arith.andi %176, %177 : vector<32x128xi1>
    %179 = arith.extui %178 : vector<32x128xi1> to vector<32x128xi32>
    %180 = arith.sitofp %179 : vector<32x128xi32> to vector<32x128xf32>
    %cst_47 = arith.constant dense<0x7F800000> : vector<128xf32>
    %181 = vector.multi_reduction <minimumf>, %180, %cst_47 [0] : vector<32x128xf32> to vector<128xf32>
    %182 = vector.shape_cast %181 : vector<128xf32> to vector<1x128xf32>
    %183 = arith.subf %9, %175 : vector<32x128xf32>
    %cst_48 = arith.constant 0.000000e+00 : f32
    %184 = vector.broadcast %cst_48 : f32 to vector<32x128xf32>
    %185 = arith.maximumf %183, %184 : vector<32x128xf32>
    %186 = arith.subf %175, %10 : vector<32x128xf32>
    %cst_49 = arith.constant 0.000000e+00 : f32
    %187 = vector.broadcast %cst_49 : f32 to vector<32x128xf32>
    %188 = arith.maximumf %186, %187 : vector<32x128xf32>
    %189 = arith.addf %185, %188 : vector<32x128xf32>
    %190 = arith.mulf %189, %189 : vector<32x128xf32>
    %cst_50 = arith.constant dense<0.000000e+00> : vector<128xf32>
    %191 = vector.multi_reduction <add>, %190, %cst_50 [0] : vector<32x128xf32> to vector<128xf32>
    %192 = vector.shape_cast %191 : vector<128xf32> to vector<1x128xf32>
    %193 = math.sqrt %192 : vector<1x128xf32>
    %194 = arith.subf %11, %175 : vector<32x128xf32>
    %cst_51 = arith.constant 0.000000e+00 : f32
    %195 = vector.broadcast %cst_51 : f32 to vector<32x128xf32>
    %196 = arith.maximumf %194, %195 : vector<32x128xf32>
    %197 = arith.subf %175, %12 : vector<32x128xf32>
    %cst_52 = arith.constant 0.000000e+00 : f32
    %198 = vector.broadcast %cst_52 : f32 to vector<32x128xf32>
    %199 = arith.maximumf %197, %198 : vector<32x128xf32>
    %200 = arith.minimumf %196, %199 : vector<32x128xf32>
    %201 = arith.mulf %200, %200 : vector<32x128xf32>
    %cst_53 = arith.constant dense<0.000000e+00> : vector<128xf32>
    %202 = vector.multi_reduction <add>, %201, %cst_53 [0] : vector<32x128xf32> to vector<128xf32>
    %203 = vector.shape_cast %202 : vector<128xf32> to vector<1x128xf32>
    %204 = math.sqrt %203 : vector<1x128xf32>
    %c0_54 = arith.constant 0 : index
    %c6 = arith.constant 6 : index
    %205 = vector.load %arg1[%c0_54, %c6] : memref<32x8xf32, #tpu.memory_space<vmem>>, vector<32x1xf32>
    %206 = vector.shape_cast %205 : vector<32x1xf32> to vector<32x1xf32>
    %207 = vector.broadcast %206 : vector<32x1xf32> to vector<32x128xf32>
    %208 = arith.cmpf ole, %4, %207 : vector<32x128xf32>
    %209 = arith.cmpf ole, %207, %5 : vector<32x128xf32>
    %210 = arith.andi %208, %209 : vector<32x128xi1>
    %211 = arith.extui %210 : vector<32x128xi1> to vector<32x128xi32>
    %212 = arith.sitofp %211 : vector<32x128xi32> to vector<32x128xf32>
    %cst_55 = arith.constant dense<0x7F800000> : vector<128xf32>
    %213 = vector.multi_reduction <minimumf>, %212, %cst_55 [0] : vector<32x128xf32> to vector<128xf32>
    %214 = vector.shape_cast %213 : vector<128xf32> to vector<1x128xf32>
    %215 = arith.subf %9, %207 : vector<32x128xf32>
    %cst_56 = arith.constant 0.000000e+00 : f32
    %216 = vector.broadcast %cst_56 : f32 to vector<32x128xf32>
    %217 = arith.maximumf %215, %216 : vector<32x128xf32>
    %218 = arith.subf %207, %10 : vector<32x128xf32>
    %cst_57 = arith.constant 0.000000e+00 : f32
    %219 = vector.broadcast %cst_57 : f32 to vector<32x128xf32>
    %220 = arith.maximumf %218, %219 : vector<32x128xf32>
    %221 = arith.addf %217, %220 : vector<32x128xf32>
    %222 = arith.mulf %221, %221 : vector<32x128xf32>
    %cst_58 = arith.constant dense<0.000000e+00> : vector<128xf32>
    %223 = vector.multi_reduction <add>, %222, %cst_58 [0] : vector<32x128xf32> to vector<128xf32>
    %224 = vector.shape_cast %223 : vector<128xf32> to vector<1x128xf32>
    %225 = math.sqrt %224 : vector<1x128xf32>
    %226 = arith.subf %11, %207 : vector<32x128xf32>
    %cst_59 = arith.constant 0.000000e+00 : f32
    %227 = vector.broadcast %cst_59 : f32 to vector<32x128xf32>
    %228 = arith.maximumf %226, %227 : vector<32x128xf32>
    %229 = arith.subf %207, %12 : vector<32x128xf32>
    %cst_60 = arith.constant 0.000000e+00 : f32
    %230 = vector.broadcast %cst_60 : f32 to vector<32x128xf32>
    %231 = arith.maximumf %229, %230 : vector<32x128xf32>
    %232 = arith.minimumf %228, %231 : vector<32x128xf32>
    %233 = arith.mulf %232, %232 : vector<32x128xf32>
    %cst_61 = arith.constant dense<0.000000e+00> : vector<128xf32>
    %234 = vector.multi_reduction <add>, %233, %cst_61 [0] : vector<32x128xf32> to vector<128xf32>
    %235 = vector.shape_cast %234 : vector<128xf32> to vector<1x128xf32>
    %236 = math.sqrt %235 : vector<1x128xf32>
    %c0_62 = arith.constant 0 : index
    %c7 = arith.constant 7 : index
    %237 = vector.load %arg1[%c0_62, %c7] : memref<32x8xf32, #tpu.memory_space<vmem>>, vector<32x1xf32>
    %238 = vector.shape_cast %237 : vector<32x1xf32> to vector<32x1xf32>
    %239 = vector.broadcast %238 : vector<32x1xf32> to vector<32x128xf32>
    %240 = arith.cmpf ole, %4, %239 : vector<32x128xf32>
    %241 = arith.cmpf ole, %239, %5 : vector<32x128xf32>
    %242 = arith.andi %240, %241 : vector<32x128xi1>
    %243 = arith.extui %242 : vector<32x128xi1> to vector<32x128xi32>
    %244 = arith.sitofp %243 : vector<32x128xi32> to vector<32x128xf32>
    %cst_63 = arith.constant dense<0x7F800000> : vector<128xf32>
    %245 = vector.multi_reduction <minimumf>, %244, %cst_63 [0] : vector<32x128xf32> to vector<128xf32>
    %246 = vector.shape_cast %245 : vector<128xf32> to vector<1x128xf32>
    %247 = arith.subf %9, %239 : vector<32x128xf32>
    %cst_64 = arith.constant 0.000000e+00 : f32
    %248 = vector.broadcast %cst_64 : f32 to vector<32x128xf32>
    %249 = arith.maximumf %247, %248 : vector<32x128xf32>
    %250 = arith.subf %239, %10 : vector<32x128xf32>
    %cst_65 = arith.constant 0.000000e+00 : f32
    %251 = vector.broadcast %cst_65 : f32 to vector<32x128xf32>
    %252 = arith.maximumf %250, %251 : vector<32x128xf32>
    %253 = arith.addf %249, %252 : vector<32x128xf32>
    %254 = arith.mulf %253, %253 : vector<32x128xf32>
    %cst_66 = arith.constant dense<0.000000e+00> : vector<128xf32>
    %255 = vector.multi_reduction <add>, %254, %cst_66 [0] : vector<32x128xf32> to vector<128xf32>
    %256 = vector.shape_cast %255 : vector<128xf32> to vector<1x128xf32>
    %257 = math.sqrt %256 : vector<1x128xf32>
    %258 = arith.subf %11, %239 : vector<32x128xf32>
    %cst_67 = arith.constant 0.000000e+00 : f32
    %259 = vector.broadcast %cst_67 : f32 to vector<32x128xf32>
    %260 = arith.maximumf %258, %259 : vector<32x128xf32>
    %261 = arith.subf %239, %12 : vector<32x128xf32>
    %cst_68 = arith.constant 0.000000e+00 : f32
    %262 = vector.broadcast %cst_68 : f32 to vector<32x128xf32>
    %263 = arith.maximumf %261, %262 : vector<32x128xf32>
    %264 = arith.minimumf %260, %263 : vector<32x128xf32>
    %265 = arith.mulf %264, %264 : vector<32x128xf32>
    %cst_69 = arith.constant dense<0.000000e+00> : vector<128xf32>
    %266 = vector.multi_reduction <add>, %265, %cst_69 [0] : vector<32x128xf32> to vector<128xf32>
    %267 = vector.shape_cast %266 : vector<128xf32> to vector<1x128xf32>
    %268 = math.sqrt %267 : vector<1x128xf32>
    %269 = tpu.concatenate %22, %54, %86, %118, %150, %182, %214, %246 in 0 : vector<1x128xf32>, vector<1x128xf32>, vector<1x128xf32>, vector<1x128xf32>, vector<1x128xf32>, vector<1x128xf32>, vector<1x128xf32>, vector<1x128xf32> -> vector<8x128xf32>
    %270 = tpu.concatenate %44, %76, %108, %140, %172, %204, %236, %268 in 0 : vector<1x128xf32>, vector<1x128xf32>, vector<1x128xf32>, vector<1x128xf32>, vector<1x128xf32>, vector<1x128xf32>, vector<1x128xf32>, vector<1x128xf32> -> vector<8x128xf32>
    %271 = tpu.concatenate %33, %65, %97, %129, %161, %193, %225, %257 in 0 : vector<1x128xf32>, vector<1x128xf32>, vector<1x128xf32>, vector<1x128xf32>, vector<1x128xf32>, vector<1x128xf32>, vector<1x128xf32>, vector<1x128xf32> -> vector<8x128xf32>
    %c0_70 = arith.constant 0 : index
    %c0_71 = arith.constant 0 : index
    %c0_72 = arith.constant 0 : index
    %272 = vector.load %arg3[%c0_70, %c0_71, %c0_72] : memref<2x8x128xf32, #tpu.memory_space<vmem>>, vector<1x8x128xf32>
    %273 = vector.shape_cast %272 : vector<1x8x128xf32> to vector<8x128xf32>
    %274 = vector.shape_cast %270 : vector<8x128xf32> to vector<1x8x128xf32>
    tpu.vector_store %arg3[%c0_70, %c0_71, %c0_72], %274 {strides = array<i32>} : memref<2x8x128xf32, #tpu.memory_space<vmem>>, vector<1x8x128xf32>,
    %c1_73 = arith.constant 1 : index
    %c0_74 = arith.constant 0 : index
    %c0_75 = arith.constant 0 : index
    %275 = vector.load %arg3[%c1_73, %c0_74, %c0_75] : memref<2x8x128xf32, #tpu.memory_space<vmem>>, vector<1x8x128xf32>
    %276 = vector.shape_cast %275 : vector<1x8x128xf32> to vector<8x128xf32>
    %277 = vector.shape_cast %271 : vector<8x128xf32> to vector<1x8x128xf32>
    tpu.vector_store %arg3[%c1_73, %c0_74, %c0_75], %277 {strides = array<i32>} : memref<2x8x128xf32, #tpu.memory_space<vmem>>, vector<1x8x128xf32>,
    %c0_76 = arith.constant 0 : index
    %c0_77 = arith.constant 0 : index
    %278 = vector.load %arg2[%c0_76, %c0_77] : memref<128x128xf32, #tpu.memory_space<vmem>>, vector<128x128xf32>
    %cst_78 = arith.constant dense<0.000000e+00> : vector<8x128xf32>
    %279 = tpu.matmul %269, %278, %cst_78 {dimension_numbers = #tpu.dot_dimension_numbers<[1], [0], [0], [1], [0, 0, 1, 1], [], []>} : vector<8x128xf32>, vector<128x128xf32>, vector<8x128xf32> -> vector<8x128xf32>
    %cst_79 = arith.constant 1.000000e+00 : f32
    %280 = vector.broadcast %cst_79 : f32 to vector<8x128xf32>
    %281 = arith.minimumf %279, %280 : vector<8x128xf32>
    %cst_80 = arith.constant 1.000000e+00 : f32
    %282 = vector.broadcast %cst_80 : f32 to vector<8x128xf32>
    %283 = arith.subf %282, %281 : vector<8x128xf32>
    %284 = arith.mulf %269, %283 : vector<8x128xf32>
    %285 = arith.fptosi %269 : vector<8x128xf32> to vector<8x128xi32>
    %c0_81 = arith.constant 0 : index
    %c0_82 = arith.constant 0 : index
    %c0_83 = arith.constant 0 : index
    %286 = vector.load %arg4[%c0_81, %c0_82, %c0_83] : memref<2x8x128xi32, #tpu.memory_space<vmem>>, vector<1x8x128xi32>
    %287 = vector.shape_cast %286 : vector<1x8x128xi32> to vector<8x128xi32>
    %288 = vector.shape_cast %285 : vector<8x128xi32> to vector<1x8x128xi32>
    tpu.vector_store %arg4[%c0_81, %c0_82, %c0_83], %288 {strides = array<i32>} : memref<2x8x128xi32, #tpu.memory_space<vmem>>, vector<1x8x128xi32>,
    %289 = arith.fptosi %284 : vector<8x128xf32> to vector<8x128xi32>
    %c1_84 = arith.constant 1 : index
    %c0_85 = arith.constant 0 : index
    %c0_86 = arith.constant 0 : index
    %290 = vector.load %arg4[%c1_84, %c0_85, %c0_86] : memref<2x8x128xi32, #tpu.memory_space<vmem>>, vector<1x8x128xi32>
    %291 = vector.shape_cast %290 : vector<1x8x128xi32> to vector<8x128xi32>
    %292 = vector.shape_cast %289 : vector<8x128xi32> to vector<1x8x128xi32>
    tpu.vector_store %arg4[%c1_84, %c0_85, %c0_86], %292 {strides = array<i32>} : memref<2x8x128xi32, #tpu.memory_space<vmem>>, vector<1x8x128xi32>,
    return
  }
}

</mosaic_0001>

<llo_original>
// kernel: geometry_net_forward.1
$region0: #{geometry_net_forward.1}
  #allocation0 [shape = 'u32[]', space=smem, size = 0x4, offset = 0x4, fixed_abs, tag = 'smem constant byte address 0x4 - core index']
  #allocation1 [shape = 'u32[144,128]{1,0:T(1,128)}', space=vmem, size = 0x12000, scoped, tag = 'internal scratch']
  %s0 = inlined_call_operand.vmem [shape: f32[2,32,128], index: 0, kind: input, shape index: {}]
  %s1 = inlined_call_operand.vmem [shape: f32[32,8], index: 1, kind: input, shape index: {}]
  %s2 = inlined_call_operand.vmem [shape: f32[128,128], index: 2, kind: input, shape index: {}]
  %s3 = inlined_call_operand.vmem [shape: f32[2,8,128], index: 3, kind: output, shape index: {0}]
  %s4 = inlined_call_operand.vmem [shape: s32[2,8,128], index: 4, kind: output, shape index: {1}]
  %5 = xla_tuple %s3, %s4
  %s6 = sld [smem:[#allocation0]]
  $region30: #{geometry_net_forward.1} parent=0
    _
  %s8 = ssub.s32 1, %s6
  %s9 = scalar_select 0, %s8, %s6
  // Predicated region
  $region2: #{geometry_net_forward.1} parent=0 // pred_check
    _
  $region3: #{geometry_net_forward.1} parent=0 // pred_check_branch
    %11 = sbr.rel (0) target = $region5
  $region4: #{geometry_net_forward.1} parent=0 // pred_region
    _
  $region5: #{geometry_net_forward.1} parent=0 // pred_fallthru
    _
  // Predicated region
  $region6: #{geometry_net_forward.1} parent=0 // pred_check
    _
  $region7: #{geometry_net_forward.1} parent=0 // pred_check_branch
    %13 = sbr.rel (0) target = $region9
  $region8: #{geometry_net_forward.1} parent=0 // pred_region
    _
  $region9: #{geometry_net_forward.1} parent=0 // pred_fallthru
    _
  // Predicated region
  $region10: #{geometry_net_forward.1} parent=0 // pred_check
    _
  $region11: #{geometry_net_forward.1} parent=0 // pred_check_branch
    %15 = sbr.rel (0) target = $region13
  $region12: #{geometry_net_forward.1} parent=0 // pred_region
    _
  $region13: #{geometry_net_forward.1} parent=0 // pred_fallthru
    _
  %v16 = vld [vmem:[%s0] sm:$0xff]
  %v17 = vld [vmem:[%s0 + $0x8] sm:$0xff]
  %v18 = vld [vmem:[%s0 + $0x10] sm:$0xff]
  %v19 = vld [vmem:[%s0 + $0x18] sm:$0xff]
  %s20 = scalar_lea.vmem %s0, 32
  %v21 = vld [vmem:[%s20] sm:$0xff]
  %v22 = vld [vmem:[%s20 + $0x8] sm:$0xff]
  %v23 = vld [vmem:[%s20 + $0x10] sm:$0xff]
  %v24 = vld [vmem:[%s20 + $0x18] sm:$0xff]
  %v25 = vmin.f32 %v16, %v21
  %v26 = vmin.f32 %v17, %v22
  %v27 = vmin.f32 %v18, %v23
  %v28 = vmin.f32 %v19, %v24
  %v29 = vmax.f32 %v16, %v21
  %v30 = vmax.f32 %v17, %v22
  %v31 = vmax.f32 %v18, %v23
  %v32 = vmax.f32 %v19, %v24
  %v33 = vsub.f32 %v29, %v25
  %v34 = vsub.f32 %v30, %v26
  %v35 = vsub.f32 %v31, %v27
  %v36 = vsub.f32 %v32, %v28
  %v37 = vmul.f32 %v33, 0.1
  %v38 = vmul.f32 %v34, 0.1
  %v39 = vmul.f32 %v35, 0.1
  %v40 = vmul.f32 %v36, 0.1
  %v41 = vadd.f32 %v25, %v37
  %v42 = vadd.f32 %v26, %v38
  %v43 = vadd.f32 %v27, %v39
  %v44 = vadd.f32 %v28, %v40
  %v45 = vsub.f32 %v29, %v37
  %v46 = vsub.f32 %v30, %v38
  %v47 = vsub.f32 %v31, %v39
  %v48 = vsub.f32 %v32, %v40
  %v49 = vadd.f32 %v29, %v37
  %v50 = vadd.f32 %v30, %v38
  %v51 = vadd.f32 %v31, %v39
  %v52 = vadd.f32 %v32, %v40
  %v53 = vsub.f32 %v25, %v37
  %v54 = vsub.f32 %v26, %v38
  %v55 = vsub.f32 %v27, %v39
  %v56 = vsub.f32 %v28, %v40
  %v57 = vld [vmem:[%s1] sm:$0xff]
  %v58 = vld [vmem:[%s1 + $0x8] sm:$0xff]
  %v59 = vld [vmem:[%s1 + $0x10] sm:$0xff]
  %v60 = vld [vmem:[%s1 + $0x18] sm:$0xff]
  %62 = vset.pattern.permute.xlu0 0
  %63 = vperm.xlu0 %62, %v57
  %v64 = vpop.permute.xlu0 %63
  %67 = vset.pattern.permute.xlu0 0
  %68 = vperm.xlu0 %67, %v58
  %v69 = vpop.permute.xlu0 %68
  %72 = vset.pattern.permute.xlu0 0
  %73 = vperm.xlu0 %72, %v59
  %v74 = vpop.permute.xlu0 %73
  %77 = vset.pattern.permute.xlu0 0
  %78 = vperm.xlu0 %77, %v60
  %v79 = vpop.permute.xlu0 %78
  %vm81 = vcmp.le.f32.partialorder %v25, %v64
  %vm82 = vcmp.le.f32.partialorder %v26, %v69
  %vm83 = vcmp.le.f32.partialorder %v27, %v74
  %vm84 = vcmp.le.f32.partialorder %v28, %v79
  %vm85 = vcmp.le.f32.partialorder %v64, %v29
  %vm86 = vcmp.le.f32.partialorder %v69, %v30
  %vm87 = vcmp.le.f32.partialorder %v74, %v31
  %vm88 = vcmp.le.f32.partialorder %v79, %v32
  %vm89 = vmand %vm81, %vm85
  %vm90 = vmand %vm82, %vm86
  %vm91 = vmand %vm83, %vm87
  %vm92 = vmand %vm84, %vm88
  %v93 = vsel %vm89, 1, 0
  %v94 = vsel %vm90, 1, 0
  %v95 = vsel %vm91, 1, 0
  %v96 = vsel %vm92, 1, 0
  %v97 = vcvt.s32.f32 %v93
  %v98 = vcvt.s32.f32 %v94
  %v99 = vcvt.s32.f32 %v95
  %v100 = vcvt.s32.f32 %v96
  %v101 = vmin.f32 %v97, %v98
  %v102 = vmin.f32 %v99, %v100
  %v103 = vmin.f32 %v101, %v102
  %v104 = vrot.slane %v103, 4
  %v105 = vmin.f32 %v103, %v104
  %v106 = vrot.slane %v105, 2
  %v107 = vmin.f32 %v105, %v106
  %v108 = vrot.slane %v107, 1
  %v109 = vmin.f32 %v107, %v108
  %v110 = vsub.f32 %v41, %v64
  %v111 = vsub.f32 %v42, %v69
  %v112 = vsub.f32 %v43, %v74
  %v113 = vsub.f32 %v44, %v79
  %v114 = vmax.f32 %v110, 0.0
  %v115 = vmax.f32 %v111, 0.0
  %v116 = vmax.f32 %v112, 0.0
  %v117 = vmax.f32 %v113, 0.0
  %v118 = vsub.f32 %v64, %v45
  %v119 = vsub.f32 %v69, %v46
  %v120 = vsub.f32 %v74, %v47
  %v121 = vsub.f32 %v79, %v48
  %v122 = vmax.f32 %v118, 0.0
  %v123 = vmax.f32 %v119, 0.0
  %v124 = vmax.f32 %v120, 0.0
  %v125 = vmax.f32 %v121, 0.0
  %v126 = vadd.f32 %v114, %v122
  %v127 = vadd.f32 %v115, %v123
  %v128 = vadd.f32 %v116, %v124
  %v129 = vadd.f32 %v117, %v125
  %v130 = vmul.f32 %v126, %v126
  %v131 = vmul.f32 %v127, %v127
  %v132 = vmul.f32 %v128, %v128
  %v133 = vmul.f32 %v129, %v129
  %v134 = vadd.f32 %v130, %v131
  %v135 = vadd.f32 %v134, %v132
  %v136 = vadd.f32 %v135, %v133
  %v137 = vrot.slane %v136, 4
  %v138 = vadd.f32 %v136, %v137
  %v139 = vrot.slane %v138, 2
  %v140 = vadd.f32 %v138, %v139
  %v141 = vrot.slane %v140, 1
  %v142 = vadd.f32 %v140, %v141
  %v143 = vrsqrt.pop %v142
  %v144 = vmul.f32 %v142, %v143
  %vm145 = vcmp.eq.f32.partialorder %v142, inf
  %v146 = vsel %vm145, %v142, %v144
  %vm147 = vcmp.eq.f32.partialorder %v142, 0.0
  %v148 = vand.u32 %v142, 2147483648
  %v149 = vsel %vm147, %v148, %v146
  %v150 = vsub.f32 %v49, %v64
  %v151 = vsub.f32 %v50, %v69
  %v152 = vsub.f32 %v51, %v74
  %v153 = vsub.f32 %v52, %v79
  %v154 = vmax.f32 %v150, 0.0
  %v155 = vmax.f32 %v151, 0.0
  %v156 = vmax.f32 %v152, 0.0
  %v157 = vmax.f32 %v153, 0.0
  %v158 = vsub.f32 %v64, %v53
  %v159 = vsub.f32 %v69, %v54
  %v160 = vsub.f32 %v74, %v55
  %v161 = vsub.f32 %v79, %v56
  %v162 = vmax.f32 %v158, 0.0
  %v163 = vmax.f32 %v159, 0.0
  %v164 = vmax.f32 %v160, 0.0
  %v165 = vmax.f32 %v161, 0.0
  %v166 = vmin.f32 %v154, %v162
  %v167 = vmin.f32 %v155, %v163
  %v168 = vmin.f32 %v156, %v164
  %v169 = vmin.f32 %v157, %v165
  %v170 = vmul.f32 %v166, %v166
  %v171 = vmul.f32 %v167, %v167
  %v172 = vmul.f32 %v168, %v168
  %v173 = vmul.f32 %v169, %v169
  %v174 = vadd.f32 %v170, %v171
  %v175 = vadd.f32 %v174, %v172
  %v176 = vadd.f32 %v175, %v173
  %v177 = vrot.slane %v176, 4
  %v178 = vadd.f32 %v176, %v177
  %v179 = vrot.slane %v178, 2
  %v180 = vadd.f32 %v178, %v179
  %v181 = vrot.slane %v180, 1
  %v182 = vadd.f32 %v180, %v181
  %v183 = vrsqrt.pop %v182
  %v184 = vmul.f32 %v182, %v183
  %vm185 = vcmp.eq.f32.partialorder %v182, inf
  %v186 = vsel %vm185, %v182, %v184
  %vm187 = vcmp.eq.f32.partialorder %v182, 0.0
  %v188 = vand.u32 %v182, 2147483648
  %v189 = vsel %vm187, %v188, %v186
  %190 = vset.pattern.permute.xlu0 1
  %191 = vperm.xlu0 %190, %v57
  %v192 = vpop.permute.xlu0 %191
  %194 = vset.pattern.permute.xlu0 1
  %195 = vperm.xlu0 %194, %v58
  %v196 = vpop.permute.xlu0 %195
  %198 = vset.pattern.permute.xlu0 1
  %199 = vperm.xlu0 %198, %v59
  %v200 = vpop.permute.xlu0 %199
  %202 = vset.pattern.permute.xlu0 1
  %203 = vperm.xlu0 %202, %v60
  %v204 = vpop.permute.xlu0 %203
  %vm206 = vcmp.le.f32.partialorder %v25, %v192
  %vm207 = vcmp.le.f32.partialorder %v26, %v196
  %vm208 = vcmp.le.f32.partialorder %v27, %v200
  %vm209 = vcmp.le.f32.partialorder %v28, %v204
  %vm210 = vcmp.le.f32.partialorder %v192, %v29
  %vm211 = vcmp.le.f32.partialorder %v196, %v30
  %vm212 = vcmp.le.f32.partialorder %v200, %v31
  %vm213 = vcmp.le.f32.partialorder %v204, %v32
  %vm214 = vmand %vm206, %vm210
  %vm215 = vmand %vm207, %vm211
  %vm216 = vmand %vm208, %vm212
  %vm217 = vmand %vm209, %vm213
  %v218 = vsel %vm214, 1, 0
  %v219 = vsel %vm215, 1, 0
  %v220 = vsel %vm216, 1, 0
  %v221 = vsel %vm217, 1, 0
  %v222 = vcvt.s32.f32 %v218
  %v223 = vcvt.s32.f32 %v219
  %v224 = vcvt.s32.f32 %v220
  %v225 = vcvt.s32.f32 %v221
  %v226 = vmin.f32 %v222, %v223
  %v227 = vmin.f32 %v224, %v225
  %v228 = vmin.f32 %v226, %v227
  %v229 = vrot.slane %v228, 4
  %v230 = vmin.f32 %v228, %v229
  %v231 = vrot.slane %v230, 2
  %v232 = vmin.f32 %v230, %v231
  %v233 = vrot.slane %v232, 1
  %v234 = vmin.f32 %v232, %v233
  %v235 = vsub.f32 %v41, %v192
  %v236 = vsub.f32 %v42, %v196
  %v237 = vsub.f32 %v43, %v200
  %v238 = vsub.f32 %v44, %v204
  %v239 = vmax.f32 %v235, 0.0
  %v240 = vmax.f32 %v236, 0.0
  %v241 = vmax.f32 %v237, 0.0
  %v242 = vmax.f32 %v238, 0.0
  %v243 = vsub.f32 %v192, %v45
  %v244 = vsub.f32 %v196, %v46
  %v245 = vsub.f32 %v200, %v47
  %v246 = vsub.f32 %v204, %v48
  %v247 = vmax.f32 %v243, 0.0
  %v248 = vmax.f32 %v244, 0.0
  %v249 = vmax.f32 %v245, 0.0
  %v250 = vmax.f32 %v246, 0.0
  %v251 = vadd.f32 %v239, %v247
  %v252 = vadd.f32 %v240, %v248
  %v253 = vadd.f32 %v241, %v249
  %v254 = vadd.f32 %v242, %v250
  %v255 = vmul.f32 %v251, %v251
  %v256 = vmul.f32 %v252, %v252
  %v257 = vmul.f32 %v253, %v253
  %v258 = vmul.f32 %v254, %v254
  %v259 = vadd.f32 %v255, %v256
  %v260 = vadd.f32 %v259, %v257
  %v261 = vadd.f32 %v260, %v258
  %v262 = vrot.slane %v261, 4
  %v263 = vadd.f32 %v261, %v262
  %v264 = vrot.slane %v263, 2
  %v265 = vadd.f32 %v263, %v264
  %v266 = vrot.slane %v265, 1
  %v267 = vadd.f32 %v265, %v266
  %v268 = vrsqrt.pop %v267
  %v269 = vmul.f32 %v267, %v268
  %vm270 = vcmp.eq.f32.partialorder %v267, inf
  %v271 = vsel %vm270, %v267, %v269
  %vm272 = vcmp.eq.f32.partialorder %v267, 0.0
  %v273 = vand.u32 %v267, 2147483648
  %v274 = vsel %vm272, %v273, %v271
  %v275 = vsub.f32 %v49, %v192
  %v276 = vsub.f32 %v50, %v196
  %v277 = vsub.f32 %v51, %v200
  %v278 = vsub.f32 %v52, %v204
  %v279 = vmax.f32 %v275, 0.0
  %v280 = vmax.f32 %v276, 0.0
  %v281 = vmax.f32 %v277, 0.0
  %v282 = vmax.f32 %v278, 0.0
  %v283 = vsub.f32 %v192, %v53
  %v284 = vsub.f32 %v196, %v54
  %v285 = vsub.f32 %v200, %v55
  %v286 = vsub.f32 %v204, %v56
  %v287 = vmax.f32 %v283, 0.0
  %v288 = vmax.f32 %v284, 0.0
  %v289 = vmax.f32 %v285, 0.0
  %v290 = vmax.f32 %v286, 0.0
  %v291 = vmin.f32 %v279, %v287
  %v292 = vmin.f32 %v280, %v288
  %v293 = vmin.f32 %v281, %v289
  %v294 = vmin.f32 %v282, %v290
  %v295 = vmul.f32 %v291, %v291
  %v296 = vmul.f32 %v292, %v292
  %v297 = vmul.f32 %v293, %v293
  %v298 = vmul.f32 %v294, %v294
  %v299 = vadd.f32 %v295, %v296
  %v300 = vadd.f32 %v299, %v297
  %v301 = vadd.f32 %v300, %v298
  %v302 = vrot.slane %v301, 4
  %v303 = vadd.f32 %v301, %v302
  %v304 = vrot.slane %v303, 2
  %v305 = vadd.f32 %v303, %v304
  %v306 = vrot.slane %v305, 1
  %v307 = vadd.f32 %v305, %v306
  %v308 = vrsqrt.pop %v307
  %v309 = vmul.f32 %v307, %v308
  %vm310 = vcmp.eq.f32.partialorder %v307, inf
  %v311 = vsel %vm310, %v307, %v309
  %vm312 = vcmp.eq.f32.partialorder %v307, 0.0
  %v313 = vand.u32 %v307, 2147483648
  %v314 = vsel %vm312, %v313, %v311
  %315 = vset.pattern.permute.xlu0 2
  %316 = vperm.xlu0 %315, %v57
  %v317 = vpop.permute.xlu0 %316
  %319 = vset.pattern.permute.xlu0 2
  %320 = vperm.xlu0 %319, %v58
  %v321 = vpop.permute.xlu0 %320
  %323 = vset.pattern.permute.xlu0 2
  %324 = vperm.xlu0 %323, %v59
  %v325 = vpop.permute.xlu0 %324
  %327 = vset.pattern.permute.xlu0 2
  %328 = vperm.xlu0 %327, %v60
  %v329 = vpop.permute.xlu0 %328
  %vm331 = vcmp.le.f32.partialorder %v25, %v317
  %vm332 = vcmp.le.f32.partialorder %v26, %v321
  %vm333 = vcmp.le.f32.partialorder %v27, %v325
  %vm334 = vcmp.le.f32.partialorder %v28, %v329
  %vm335 = vcmp.le.f32.partialorder %v317, %v29
  %vm336 = vcmp.le.f32.partialorder %v321, %v30
  %vm337 = vcmp.le.f32.partialorder %v325, %v31
  %vm338 = vcmp.le.f32.partialorder %v329, %v32
  %vm339 = vmand %vm331, %vm335
  %vm340 = vmand %vm332, %vm336
  %vm341 = vmand %vm333, %vm337
  %vm342 = vmand %vm334, %vm338
  %v343 = vsel %vm339, 1, 0
  %v344 = vsel %vm340, 1, 0
  %v345 = vsel %vm341, 1, 0
  %v346 = vsel %vm342, 1, 0
  %v347 = vcvt.s32.f32 %v343
  %v348 = vcvt.s32.f32 %v344
  %v349 = vcvt.s32.f32 %v345
  %v350 = vcvt.s32.f32 %v346
  %v351 = vmin.f32 %v347, %v348
  %v352 = vmin.f32 %v349, %v350
  %v353 = vmin.f32 %v351, %v352
  %v354 = vrot.slane %v353, 4
  %v355 = vmin.f32 %v353, %v354
  %v356 = vrot.slane %v355, 2
  %v357 = vmin.f32 %v355, %v356
  %v358 = vrot.slane %v357, 1
  %v359 = vmin.f32 %v357, %v358
  %v360 = vsub.f32 %v41, %v317
  %v361 = vsub.f32 %v42, %v321
  %v362 = vsub.f32 %v43, %v325
  %v363 = vsub.f32 %v44, %v329
  %v364 = vmax.f32 %v360, 0.0
  %v365 = vmax.f32 %v361, 0.0
  %v366 = vmax.f32 %v362, 0.0
  %v367 = vmax.f32 %v363, 0.0
  %v368 = vsub.f32 %v317, %v45
  %v369 = vsub.f32 %v321, %v46
  %v370 = vsub.f32 %v325, %v47
  %v371 = vsub.f32 %v329, %v48
  %v372 = vmax.f32 %v368, 0.0
  %v373 = vmax.f32 %v369, 0.0
  %v374 = vmax.f32 %v370, 0.0
  %v375 = vmax.f32 %v371, 0.0
  %v376 = vadd.f32 %v364, %v372
  %v377 = vadd.f32 %v365, %v373
  %v378 = vadd.f32 %v366, %v374
  %v379 = vadd.f32 %v367, %v375
  %v380 = vmul.f32 %v376, %v376
  %v381 = vmul.f32 %v377, %v377
  %v382 = vmul.f32 %v378, %v378
  %v383 = vmul.f32 %v379, %v379
  %v384 = vadd.f32 %v380, %v381
  %v385 = vadd.f32 %v384, %v382
  %v386 = vadd.f32 %v385, %v383
  %v387 = vrot.slane %v386, 4
  %v388 = vadd.f32 %v386, %v387
  %v389 = vrot.slane %v388, 2
  %v390 = vadd.f32 %v388, %v389
  %v391 = vrot.slane %v390, 1
  %v392 = vadd.f32 %v390, %v391
  %v393 = vrsqrt.pop %v392
  %v394 = vmul.f32 %v392, %v393
  %vm395 = vcmp.eq.f32.partialorder %v392, inf
  %v396 = vsel %vm395, %v392, %v394
  %vm397 = vcmp.eq.f32.partialorder %v392, 0.0
  %v398 = vand.u32 %v392, 2147483648
  %v399 = vsel %vm397, %v398, %v396
  %v400 = vsub.f32 %v49, %v317
  %v401 = vsub.f32 %v50, %v321
  %v402 = vsub.f32 %v51, %v325
  %v403 = vsub.f32 %v52, %v329
  %v404 = vmax.f32 %v400, 0.0
  %v405 = vmax.f32 %v401, 0.0
  %v406 = vmax.f32 %v402, 0.0
  %v407 = vmax.f32 %v403, 0.0
  %v408 = vsub.f32 %v317, %v53
  %v409 = vsub.f32 %v321, %v54
  %v410 = vsub.f32 %v325, %v55
  %v411 = vsub.f32 %v329, %v56
  %v412 = vmax.f32 %v408, 0.0
  %v413 = vmax.f32 %v409, 0.0
  %v414 = vmax.f32 %v410, 0.0
  %v415 = vmax.f32 %v411, 0.0
  %v416 = vmin.f32 %v404, %v412
  %v417 = vmin.f32 %v405, %v413
  %v418 = vmin.f32 %v406, %v414
  %v419 = vmin.f32 %v407, %v415
  %v420 = vmul.f32 %v416, %v416
  %v421 = vmul.f32 %v417, %v417
  %v422 = vmul.f32 %v418, %v418
  %v423 = vmul.f32 %v419, %v419
  %v424 = vadd.f32 %v420, %v421
  %v425 = vadd.f32 %v424, %v422
  %v426 = vadd.f32 %v425, %v423
  %v427 = vrot.slane %v426, 4
  %v428 = vadd.f32 %v426, %v427
  %v429 = vrot.slane %v428, 2
  %v430 = vadd.f32 %v428, %v429
  %v431 = vrot.slane %v430, 1
  %v432 = vadd.f32 %v430, %v431
  %v433 = vrsqrt.pop %v432
  %v434 = vmul.f32 %v432, %v433
  %vm435 = vcmp.eq.f32.partialorder %v432, inf
  %v436 = vsel %vm435, %v432, %v434
  %vm437 = vcmp.eq.f32.partialorder %v432, 0.0
  %v438 = vand.u32 %v432, 2147483648
  %v439 = vsel %vm437, %v438, %v436
  %440 = vset.pattern.permute.xlu0 3
  %441 = vperm.xlu0 %440, %v57
  %v442 = vpop.permute.xlu0 %441
  %444 = vset.pattern.permute.xlu0 3
  %445 = vperm.xlu0 %444, %v58
  %v446 = vpop.permute.xlu0 %445
  %448 = vset.pattern.permute.xlu0 3
  %449 = vperm.xlu0 %448, %v59
  %v450 = vpop.permute.xlu0 %449
  %452 = vset.pattern.permute.xlu0 3
  %453 = vperm.xlu0 %452, %v60
  %v454 = vpop.permute.xlu0 %453
  %vm456 = vcmp.le.f32.partialorder %v25, %v442
  %vm457 = vcmp.le.f32.partialorder %v26, %v446
  %vm458 = vcmp.le.f32.partialorder %v27, %v450
  %vm459 = vcmp.le.f32.partialorder %v28, %v454
  %vm460 = vcmp.le.f32.partialorder %v442, %v29
  %vm461 = vcmp.le.f32.partialorder %v446, %v30
  %vm462 = vcmp.le.f32.partialorder %v450, %v31
  %vm463 = vcmp.le.f32.partialorder %v454, %v32
  %vm464 = vmand %vm456, %vm460
  %vm465 = vmand %vm457, %vm461
  %vm466 = vmand %vm458, %vm462
  %vm467 = vmand %vm459, %vm463
  %v468 = vsel %vm464, 1, 0
  %v469 = vsel %vm465, 1, 0
  %v470 = vsel %vm466, 1, 0
  %v471 = vsel %vm467, 1, 0
  %v472 = vcvt.s32.f32 %v468
  %v473 = vcvt.s32.f32 %v469
  %v474 = vcvt.s32.f32 %v470
  %v475 = vcvt.s32.f32 %v471
  %v476 = vmin.f32 %v472, %v473
  %v477 = vmin.f32 %v474, %v475
  %v478 = vmin.f32 %v476, %v477
  %v479 = vrot.slane %v478, 4
  %v480 = vmin.f32 %v478, %v479
  %v481 = vrot.slane %v480, 2
  %v482 = vmin.f32 %v480, %v481
  %v483 = vrot.slane %v482, 1
  %v484 = vmin.f32 %v482, %v483
  %v485 = vsub.f32 %v41, %v442
  %v486 = vsub.f32 %v42, %v446
  %v487 = vsub.f32 %v43, %v450
  %v488 = vsub.f32 %v44, %v454
  %v489 = vmax.f32 %v485, 0.0
  %v490 = vmax.f32 %v486, 0.0
  %v491 = vmax.f32 %v487, 0.0
  %v492 = vmax.f32 %v488, 0.0
  %v493 = vsub.f32 %v442, %v45
  %v494 = vsub.f32 %v446, %v46
  %v495 = vsub.f32 %v450, %v47
  %v496 = vsub.f32 %v454, %v48
  %v497 = vmax.f32 %v493, 0.0
  %v498 = vmax.f32 %v494, 0.0
  %v499 = vmax.f32 %v495, 0.0
  %v500 = vmax.f32 %v496, 0.0
  %v501 = vadd.f32 %v489, %v497
  %v502 = vadd.f32 %v490, %v498
  %v503 = vadd.f32 %v491, %v499
  %v504 = vadd.f32 %v492, %v500
  %v505 = vmul.f32 %v501, %v501
  %v506 = vmul.f32 %v502, %v502
  %v507 = vmul.f32 %v503, %v503
  %v508 = vmul.f32 %v504, %v504
  %v509 = vadd.f32 %v505, %v506
  %v510 = vadd.f32 %v509, %v507
  %v511 = vadd.f32 %v510, %v508
  %v512 = vrot.slane %v511, 4
  %v513 = vadd.f32 %v511, %v512
  %v514 = vrot.slane %v513, 2
  %v515 = vadd.f32 %v513, %v514
  %v516 = vrot.slane %v515, 1
  %v517 = vadd.f32 %v515, %v516
  %v518 = vrsqrt.pop %v517
  %v519 = vmul.f32 %v517, %v518
  %vm520 = vcmp.eq.f32.partialorder %v517, inf
  %v521 = vsel %vm520, %v517, %v519
  %vm522 = vcmp.eq.f32.partialorder %v517, 0.0
  %v523 = vand.u32 %v517, 2147483648
  %v524 = vsel %vm522, %v523, %v521
  %v525 = vsub.f32 %v49, %v442
  %v526 = vsub.f32 %v50, %v446
  %v527 = vsub.f32 %v51, %v450
  %v528 = vsub.f32 %v52, %v454
  %v529 = vmax.f32 %v525, 0.0
  %v530 = vmax.f32 %v526, 0.0
  %v531 = vmax.f32 %v527, 0.0
  %v532 = vmax.f32 %v528, 0.0
  %v533 = vsub.f32 %v442, %v53
  %v534 = vsub.f32 %v446, %v54
  %v535 = vsub.f32 %v450, %v55
  %v536 = vsub.f32 %v454, %v56
  %v537 = vmax.f32 %v533, 0.0
  %v538 = vmax.f32 %v534, 0.0
  %v539 = vmax.f32 %v535, 0.0
  %v540 = vmax.f32 %v536, 0.0
  %v541 = vmin.f32 %v529, %v537
  %v542 = vmin.f32 %v530, %v538
  %v543 = vmin.f32 %v531, %v539
  %v544 = vmin.f32 %v532, %v540
  %v545 = vmul.f32 %v541, %v541
  %v546 = vmul.f32 %v542, %v542
  %v547 = vmul.f32 %v543, %v543
  %v548 = vmul.f32 %v544, %v544
  %v549 = vadd.f32 %v545, %v546
  %v550 = vadd.f32 %v549, %v547
  %v551 = vadd.f32 %v550, %v548
  %v552 = vrot.slane %v551, 4
  %v553 = vadd.f32 %v551, %v552
  %v554 = vrot.slane %v553, 2
  %v555 = vadd.f32 %v553, %v554
  %v556 = vrot.slane %v555, 1
  %v557 = vadd.f32 %v555, %v556
  %v558 = vrsqrt.pop %v557
  %v559 = vmul.f32 %v557, %v558
  %vm560 = vcmp.eq.f32.partialorder %v557, inf
  %v561 = vsel %vm560, %v557, %v559
  %vm562 = vcmp.eq.f32.partialorder %v557, 0.0
  %v563 = vand.u32 %v557, 2147483648
  %v564 = vsel %vm562, %v563, %v561
  %565 = vset.pattern.permute.xlu0 4
  %566 = vperm.xlu0 %565, %v57
  %v567 = vpop.permute.xlu0 %566
  %569 = vset.pattern.permute.xlu0 4
  %570 = vperm.xlu0 %569, %v58
  %v571 = vpop.permute.xlu0 %570
  %573 = vset.pattern.permute.xlu0 4
  %574 = vperm.xlu0 %573, %v59
  %v575 = vpop.permute.xlu0 %574
  %577 = vset.pattern.permute.xlu0 4
  %578 = vperm.xlu0 %577, %v60
  %v579 = vpop.permute.xlu0 %578
  %vm581 = vcmp.le.f32.partialorder %v25, %v567
  %vm582 = vcmp.le.f32.partialorder %v26, %v571
  %vm583 = vcmp.le.f32.partialorder %v27, %v575
  %vm584 = vcmp.le.f32.partialorder %v28, %v579
  %vm585 = vcmp.le.f32.partialorder %v567, %v29
  %vm586 = vcmp.le.f32.partialorder %v571, %v30
  %vm587 = vcmp.le.f32.partialorder %v575, %v31
  %vm588 = vcmp.le.f32.partialorder %v579, %v32
  %vm589 = vmand %vm581, %vm585
  %vm590 = vmand %vm582, %vm586
  %vm591 = vmand %vm583, %vm587
  %vm592 = vmand %vm584, %vm588
  %v593 = vsel %vm589, 1, 0
  %v594 = vsel %vm590, 1, 0
  %v595 = vsel %vm591, 1, 0
  %v596 = vsel %vm592, 1, 0
  %v597 = vcvt.s32.f32 %v593
  %v598 = vcvt.s32.f32 %v594
  %v599 = vcvt.s32.f32 %v595
  %v600 = vcvt.s32.f32 %v596
  %v601 = vmin.f32 %v597, %v598
  %v602 = vmin.f32 %v599, %v600
  %v603 = vmin.f32 %v601, %v602
  %v604 = vrot.slane %v603, 4
  %v605 = vmin.f32 %v603, %v604
  %v606 = vrot.slane %v605, 2
  %v607 = vmin.f32 %v605, %v606
  %v608 = vrot.slane %v607, 1
  %v609 = vmin.f32 %v607, %v608
  %v610 = vsub.f32 %v41, %v567
  %v611 = vsub.f32 %v42, %v571
  %v612 = vsub.f32 %v43, %v575
  %v613 = vsub.f32 %v44, %v579
  %v614 = vmax.f32 %v610, 0.0
  %v615 = vmax.f32 %v611, 0.0
  %v616 = vmax.f32 %v612, 0.0
  %v617 = vmax.f32 %v613, 0.0
  %v618 = vsub.f32 %v567, %v45
  %v619 = vsub.f32 %v571, %v46
  %v620 = vsub.f32 %v575, %v47
  %v621 = vsub.f32 %v579, %v48
  %v622 = vmax.f32 %v618, 0.0
  %v623 = vmax.f32 %v619, 0.0
  %v624 = vmax.f32 %v620, 0.0
  %v625 = vmax.f32 %v621, 0.0
  %v626 = vadd.f32 %v614, %v622
  %v627 = vadd.f32 %v615, %v623
  %v628 = vadd.f32 %v616, %v624
  %v629 = vadd.f32 %v617, %v625
  %v630 = vmul.f32 %v626, %v626
  %v631 = vmul.f32 %v627, %v627
  %v632 = vmul.f32 %v628, %v628
  %v633 = vmul.f32 %v629, %v629
  %v634 = vadd.f32 %v630, %v631
  %v635 = vadd.f32 %v634, %v632
  %v636 = vadd.f32 %v635, %v633
  %v637 = vrot.slane %v636, 4
  %v638 = vadd.f32 %v636, %v637
  %v639 = vrot.slane %v638, 2
  %v640 = vadd.f32 %v638, %v639
  %v641 = vrot.slane %v640, 1
  %v642 = vadd.f32 %v640, %v641
  %v643 = vrsqrt.pop %v642
  %v644 = vmul.f32 %v642, %v643
  %vm645 = vcmp.eq.f32.partialorder %v642, inf
  %v646 = vsel %vm645, %v642, %v644
  %vm647 = vcmp.eq.f32.partialorder %v642, 0.0
  %v648 = vand.u32 %v642, 2147483648
  %v649 = vsel %vm647, %v648, %v646
  %v650 = vsub.f32 %v49, %v567
  %v651 = vsub.f32 %v50, %v571
  %v652 = vsub.f32 %v51, %v575
  %v653 = vsub.f32 %v52, %v579
  %v654 = vmax.f32 %v650, 0.0
  %v655 = vmax.f32 %v651, 0.0
  %v656 = vmax.f32 %v652, 0.0
  %v657 = vmax.f32 %v653, 0.0
  %v658 = vsub.f32 %v567, %v53
  %v659 = vsub.f32 %v571, %v54
  %v660 = vsub.f32 %v575, %v55
  %v661 = vsub.f32 %v579, %v56
  %v662 = vmax.f32 %v658, 0.0
  %v663 = vmax.f32 %v659, 0.0
  %v664 = vmax.f32 %v660, 0.0
  %v665 = vmax.f32 %v661, 0.0
  %v666 = vmin.f32 %v654, %v662
  %v667 = vmin.f32 %v655, %v663
  %v668 = vmin.f32 %v656, %v664
  %v669 = vmin.f32 %v657, %v665
  %v670 = vmul.f32 %v666, %v666
  %v671 = vmul.f32 %v667, %v667
  %v672 = vmul.f32 %v668, %v668
  %v673 = vmul.f32 %v669, %v669
  %v674 = vadd.f32 %v670, %v671
  %v675 = vadd.f32 %v674, %v672
  %v676 = vadd.f32 %v675, %v673
  %v677 = vrot.slane %v676, 4
  %v678 = vadd.f32 %v676, %v677
  %v679 = vrot.slane %v678, 2
  %v680 = vadd.f32 %v678, %v679
  %v681 = vrot.slane %v680, 1
  %v682 = vadd.f32 %v680, %v681
  %v683 = vrsqrt.pop %v682
  %v684 = vmul.f32 %v682, %v683
  %vm685 = vcmp.eq.f32.partialorder %v682, inf
  %v686 = vsel %vm685, %v682, %v684
  %vm687 = vcmp.eq.f32.partialorder %v682, 0.0
  %v688 = vand.u32 %v682, 2147483648
  %v689 = vsel %vm687, %v688, %v686
  %690 = vset.pattern.permute.xlu0 5
  %691 = vperm.xlu0 %690, %v57
  %v692 = vpop.permute.xlu0 %691
  %694 = vset.pattern.permute.xlu0 5
  %695 = vperm.xlu0 %694, %v58
  %v696 = vpop.permute.xlu0 %695
  %698 = vset.pattern.permute.xlu0 5
  %699 = vperm.xlu0 %698, %v59
  %v700 = vpop.permute.xlu0 %699
  %702 = vset.pattern.permute.xlu0 5
  %703 = vperm.xlu0 %702, %v60
  %v704 = vpop.permute.xlu0 %703
  %vm706 = vcmp.le.f32.partialorder %v25, %v692
  %vm707 = vcmp.le.f32.partialorder %v26, %v696
  %vm708 = vcmp.le.f32.partialorder %v27, %v700
  %vm709 = vcmp.le.f32.partialorder %v28, %v704
  %vm710 = vcmp.le.f32.partialorder %v692, %v29
  %vm711 = vcmp.le.f32.partialorder %v696, %v30
  %vm712 = vcmp.le.f32.partialorder %v700, %v31
  %vm713 = vcmp.le.f32.partialorder %v704, %v32
  %vm714 = vmand %vm706, %vm710
  %vm715 = vmand %vm707, %vm711
  %vm716 = vmand %vm708, %vm712
  %vm717 = vmand %vm709, %vm713
  %v718 = vsel %vm714, 1, 0
  %v719 = vsel %vm715, 1, 0
  %v720 = vsel %vm716, 1, 0
  %v721 = vsel %vm717, 1, 0
  %v722 = vcvt.s32.f32 %v718
  %v723 = vcvt.s32.f32 %v719
  %v724 = vcvt.s32.f32 %v720
  %v725 = vcvt.s32.f32 %v721
  %v726 = vmin.f32 %v722, %v723
  %v727 = vmin.f32 %v724, %v725
  %v728 = vmin.f32 %v726, %v727
  %v729 = vrot.slane %v728, 4
  %v730 = vmin.f32 %v728, %v729
  %v731 = vrot.slane %v730, 2
  %v732 = vmin.f32 %v730, %v731
  %v733 = vrot.slane %v732, 1
  %v734 = vmin.f32 %v732, %v733
  %v735 = vsub.f32 %v41, %v692
  %v736 = vsub.f32 %v42, %v696
  %v737 = vsub.f32 %v43, %v700
  %v738 = vsub.f32 %v44, %v704
  %v739 = vmax.f32 %v735, 0.0
  %v740 = vmax.f32 %v736, 0.0
  %v741 = vmax.f32 %v737, 0.0
  %v742 = vmax.f32 %v738, 0.0
  %v743 = vsub.f32 %v692, %v45
  %v744 = vsub.f32 %v696, %v46
  %v745 = vsub.f32 %v700, %v47
  %v746 = vsub.f32 %v704, %v48
  %v747 = vmax.f32 %v743, 0.0
  %v748 = vmax.f32 %v744, 0.0
  %v749 = vmax.f32 %v745, 0.0
  %v750 = vmax.f32 %v746, 0.0
  %v751 = vadd.f32 %v739, %v747
  %v752 = vadd.f32 %v740, %v748
  %v753 = vadd.f32 %v741, %v749
  %v754 = vadd.f32 %v742, %v750
  %v755 = vmul.f32 %v751, %v751
  %v756 = vmul.f32 %v752, %v752
  %v757 = vmul.f32 %v753, %v753
  %v758 = vmul.f32 %v754, %v754
  %v759 = vadd.f32 %v755, %v756
  %v760 = vadd.f32 %v759, %v757
  %v761 = vadd.f32 %v760, %v758
  %v762 = vrot.slane %v761, 4
  %v763 = vadd.f32 %v761, %v762
  %v764 = vrot.slane %v763, 2
  %v765 = vadd.f32 %v763, %v764
  %v766 = vrot.slane %v765, 1
  %v767 = vadd.f32 %v765, %v766
  %v768 = vrsqrt.pop %v767
  %v769 = vmul.f32 %v767, %v768
  %vm770 = vcmp.eq.f32.partialorder %v767, inf
  %v771 = vsel %vm770, %v767, %v769
  %vm772 = vcmp.eq.f32.partialorder %v767, 0.0
  %v773 = vand.u32 %v767, 2147483648
  %v774 = vsel %vm772, %v773, %v771
  %v775 = vsub.f32 %v49, %v692
  %v776 = vsub.f32 %v50, %v696
  %v777 = vsub.f32 %v51, %v700
  %v778 = vsub.f32 %v52, %v704
  %v779 = vmax.f32 %v775, 0.0
  %v780 = vmax.f32 %v776, 0.0
  %v781 = vmax.f32 %v777, 0.0
  %v782 = vmax.f32 %v778, 0.0
  %v783 = vsub.f32 %v692, %v53
  %v784 = vsub.f32 %v696, %v54
  %v785 = vsub.f32 %v700, %v55
  %v786 = vsub.f32 %v704, %v56
  %v787 = vmax.f32 %v783, 0.0
  %v788 = vmax.f32 %v784, 0.0
  %v789 = vmax.f32 %v785, 0.0
  %v790 = vmax.f32 %v786, 0.0
  %v791 = vmin.f32 %v779, %v787
  %v792 = vmin.f32 %v780, %v788
  %v793 = vmin.f32 %v781, %v789
  %v794 = vmin.f32 %v782, %v790
  %v795 = vmul.f32 %v791, %v791
  %v796 = vmul.f32 %v792, %v792
  %v797 = vmul.f32 %v793, %v793
  %v798 = vmul.f32 %v794, %v794
  %v799 = vadd.f32 %v795, %v796
  %v800 = vadd.f32 %v799, %v797
  %v801 = vadd.f32 %v800, %v798
  %v802 = vrot.slane %v801, 4
  %v803 = vadd.f32 %v801, %v802
  %v804 = vrot.slane %v803, 2
  %v805 = vadd.f32 %v803, %v804
  %v806 = vrot.slane %v805, 1
  %v807 = vadd.f32 %v805, %v806
  %v808 = vrsqrt.pop %v807
  %v809 = vmul.f32 %v807, %v808
  %vm810 = vcmp.eq.f32.partialorder %v807, inf
  %v811 = vsel %vm810, %v807, %v809
  %vm812 = vcmp.eq.f32.partialorder %v807, 0.0
  %v813 = vand.u32 %v807, 2147483648
  %v814 = vsel %vm812, %v813, %v811
  %815 = vset.pattern.permute.xlu0 6
  %816 = vperm.xlu0 %815, %v57
  %v817 = vpop.permute.xlu0 %816
  %819 = vset.pattern.permute.xlu0 6
  %820 = vperm.xlu0 %819, %v58
  %v821 = vpop.permute.xlu0 %820
  %823 = vset.pattern.permute.xlu0 6
  %824 = vperm.xlu0 %823, %v59
  %v825 = vpop.permute.xlu0 %824
  %827 = vset.pattern.permute.xlu0 6
  %828 = vperm.xlu0 %827, %v60
  %v829 = vpop.permute.xlu0 %828
  %vm831 = vcmp.le.f32.partialorder %v25, %v817
  %vm832 = vcmp.le.f32.partialorder %v26, %v821
  %vm833 = vcmp.le.f32.partialorder %v27, %v825
  %vm834 = vcmp.le.f32.partialorder %v28, %v829
  %vm835 = vcmp.le.f32.partialorder %v817, %v29
  %vm836 = vcmp.le.f32.partialorder %v821, %v30
  %vm837 = vcmp.le.f32.partialorder %v825, %v31
  %vm838 = vcmp.le.f32.partialorder %v829, %v32
  %vm839 = vmand %vm831, %vm835
  %vm840 = vmand %vm832, %vm836
  %vm841 = vmand %vm833, %vm837
  %vm842 = vmand %vm834, %vm838
  %v843 = vsel %vm839, 1, 0
  %v844 = vsel %vm840, 1, 0
  %v845 = vsel %vm841, 1, 0
  %v846 = vsel %vm842, 1, 0
  %v847 = vcvt.s32.f32 %v843
  %v848 = vcvt.s32.f32 %v844
  %v849 = vcvt.s32.f32 %v845
  %v850 = vcvt.s32.f32 %v846
  %v851 = vmin.f32 %v847, %v848
  %v852 = vmin.f32 %v849, %v850
  %v853 = vmin.f32 %v851, %v852
  %v854 = vrot.slane %v853, 4
  %v855 = vmin.f32 %v853, %v854
  %v856 = vrot.slane %v855, 2
  %v857 = vmin.f32 %v855, %v856
  %v858 = vrot.slane %v857, 1
  %v859 = vmin.f32 %v857, %v858
  %v860 = vsub.f32 %v41, %v817
  %v861 = vsub.f32 %v42, %v821
  %v862 = vsub.f32 %v43, %v825
  %v863 = vsub.f32 %v44, %v829
  %v864 = vmax.f32 %v860, 0.0
  %v865 = vmax.f32 %v861, 0.0
  %v866 = vmax.f32 %v862, 0.0
  %v867 = vmax.f32 %v863, 0.0
  %v868 = vsub.f32 %v817, %v45
  %v869 = vsub.f32 %v821, %v46
  %v870 = vsub.f32 %v825, %v47
  %v871 = vsub.f32 %v829, %v48
  %v872 = vmax.f32 %v868, 0.0
  %v873 = vmax.f32 %v869, 0.0
  %v874 = vmax.f32 %v870, 0.0
  %v875 = vmax.f32 %v871, 0.0
  %v876 = vadd.f32 %v864, %v872
  %v877 = vadd.f32 %v865, %v873
  %v878 = vadd.f32 %v866, %v874
  %v879 = vadd.f32 %v867, %v875
  %v880 = vmul.f32 %v876, %v876
  %v881 = vmul.f32 %v877, %v877
  %v882 = vmul.f32 %v878, %v878
  %v883 = vmul.f32 %v879, %v879
  %v884 = vadd.f32 %v880, %v881
  %v885 = vadd.f32 %v884, %v882
  %v886 = vadd.f32 %v885, %v883
  %v887 = vrot.slane %v886, 4
  %v888 = vadd.f32 %v886, %v887
  %v889 = vrot.slane %v888, 2
  %v890 = vadd.f32 %v888, %v889
  %v891 = vrot.slane %v890, 1
  %v892 = vadd.f32 %v890, %v891
  %v893 = vrsqrt.pop %v892
  %v894 = vmul.f32 %v892, %v893
  %vm895 = vcmp.eq.f32.partialorder %v892, inf
  %v896 = vsel %vm895, %v892, %v894
  %vm897 = vcmp.eq.f32.partialorder %v892, 0.0
  %v898 = vand.u32 %v892, 2147483648
  %v899 = vsel %vm897, %v898, %v896
  %v900 = vsub.f32 %v49, %v817
  %v901 = vsub.f32 %v50, %v821
  %v902 = vsub.f32 %v51, %v825
  %v903 = vsub.f32 %v52, %v829
  %v904 = vmax.f32 %v900, 0.0
  %v905 = vmax.f32 %v901, 0.0
  %v906 = vmax.f32 %v902, 0.0
  %v907 = vmax.f32 %v903, 0.0
  %v908 = vsub.f32 %v817, %v53
  %v909 = vsub.f32 %v821, %v54
  %v910 = vsub.f32 %v825, %v55
  %v911 = vsub.f32 %v829, %v56
  %v912 = vmax.f32 %v908, 0.0
  %v913 = vmax.f32 %v909, 0.0
  %v914 = vmax.f32 %v910, 0.0
  %v915 = vmax.f32 %v911, 0.0
  %v916 = vmin.f32 %v904, %v912
  %v917 = vmin.f32 %v905, %v913
  %v918 = vmin.f32 %v906, %v914
  %v919 = vmin.f32 %v907, %v915
  %v920 = vmul.f32 %v916, %v916
  %v921 = vmul.f32 %v917, %v917
  %v922 = vmul.f32 %v918, %v918
  %v923 = vmul.f32 %v919, %v919
  %v924 = vadd.f32 %v920, %v921
  %v925 = vadd.f32 %v924, %v922
  %v926 = vadd.f32 %v925, %v923
  %v927 = vrot.slane %v926, 4
  %v928 = vadd.f32 %v926, %v927
  %v929 = vrot.slane %v928, 2
  %v930 = vadd.f32 %v928, %v929
  %v931 = vrot.slane %v930, 1
  %v932 = vadd.f32 %v930, %v931
  %v933 = vrsqrt.pop %v932
  %v934 = vmul.f32 %v932, %v933
  %vm935 = vcmp.eq.f32.partialorder %v932, inf
  %v936 = vsel %vm935, %v932, %v934
  %vm937 = vcmp.eq.f32.partialorder %v932, 0.0
  %v938 = vand.u32 %v932, 2147483648
  %v939 = vsel %vm937, %v938, %v936
  %940 = vset.pattern.permute.xlu0 7
  %941 = vperm.xlu0 %940, %v57
  %v942 = vpop.permute.xlu0 %941
  %944 = vset.pattern.permute.xlu0 7
  %945 = vperm.xlu0 %944, %v58
  %v946 = vpop.permute.xlu0 %945
  %948 = vset.pattern.permute.xlu0 7
  %949 = vperm.xlu0 %948, %v59
  %v950 = vpop.permute.xlu0 %949
  %952 = vset.pattern.permute.xlu0 7
  %953 = vperm.xlu0 %952, %v60
  %v954 = vpop.permute.xlu0 %953
  %vm956 = vcmp.le.f32.partialorder %v25, %v942
  %vm957 = vcmp.le.f32.partialorder %v26, %v946
  %vm958 = vcmp.le.f32.partialorder %v27, %v950
  %vm959 = vcmp.le.f32.partialorder %v28, %v954
  %vm960 = vcmp.le.f32.partialorder %v942, %v29
  %vm961 = vcmp.le.f32.partialorder %v946, %v30
  %vm962 = vcmp.le.f32.partialorder %v950, %v31
  %vm963 = vcmp.le.f32.partialorder %v954, %v32
  %vm964 = vmand %vm956, %vm960
  %vm965 = vmand %vm957, %vm961
  %vm966 = vmand %vm958, %vm962
  %vm967 = vmand %vm959, %vm963
  %v968 = vsel %vm964, 1, 0
  %v969 = vsel %vm965, 1, 0
  %v970 = vsel %vm966, 1, 0
  %v971 = vsel %vm967, 1, 0
  %v972 = vcvt.s32.f32 %v968
  %v973 = vcvt.s32.f32 %v969
  %v974 = vcvt.s32.f32 %v970
  %v975 = vcvt.s32.f32 %v971
  %v976 = vmin.f32 %v972, %v973
  %v977 = vmin.f32 %v974, %v975
  %v978 = vmin.f32 %v976, %v977
  %v979 = vrot.slane %v978, 4
  %v980 = vmin.f32 %v978, %v979
  %v981 = vrot.slane %v980, 2
  %v982 = vmin.f32 %v980, %v981
  %v983 = vrot.slane %v982, 1
  %v984 = vmin.f32 %v982, %v983
  %v985 = vsub.f32 %v41, %v942
  %v986 = vsub.f32 %v42, %v946
  %v987 = vsub.f32 %v43, %v950
  %v988 = vsub.f32 %v44, %v954
  %v989 = vmax.f32 %v985, 0.0
  %v990 = vmax.f32 %v986, 0.0
  %v991 = vmax.f32 %v987, 0.0
  %v992 = vmax.f32 %v988, 0.0
  %v993 = vsub.f32 %v942, %v45
  %v994 = vsub.f32 %v946, %v46
  %v995 = vsub.f32 %v950, %v47
  %v996 = vsub.f32 %v954, %v48
  %v997 = vmax.f32 %v993, 0.0
  %v998 = vmax.f32 %v994, 0.0
  %v999 = vmax.f32 %v995, 0.0
  %v1000 = vmax.f32 %v996, 0.0
  %v1001 = vadd.f32 %v989, %v997
  %v1002 = vadd.f32 %v990, %v998
  %v1003 = vadd.f32 %v991, %v999
  %v1004 = vadd.f32 %v992, %v1000
  %v1005 = vmul.f32 %v1001, %v1001
  %v1006 = vmul.f32 %v1002, %v1002
  %v1007 = vmul.f32 %v1003, %v1003
  %v1008 = vmul.f32 %v1004, %v1004
  %v1009 = vadd.f32 %v1005, %v1006
  %v1010 = vadd.f32 %v1009, %v1007
  %v1011 = vadd.f32 %v1010, %v1008
  %v1012 = vrot.slane %v1011, 4
  %v1013 = vadd.f32 %v1011, %v1012
  %v1014 = vrot.slane %v1013, 2
  %v1015 = vadd.f32 %v1013, %v1014
  %v1016 = vrot.slane %v1015, 1
  %v1017 = vadd.f32 %v1015, %v1016
  %v1018 = vrsqrt.pop %v1017
  %v1019 = vmul.f32 %v1017, %v1018
  %vm1020 = vcmp.eq.f32.partialorder %v1017, inf
  %v1021 = vsel %vm1020, %v1017, %v1019
  %vm1022 = vcmp.eq.f32.partialorder %v1017, 0.0
  %v1023 = vand.u32 %v1017, 2147483648
  %v1024 = vsel %vm1022, %v1023, %v1021
  %v1025 = vsub.f32 %v49, %v942
  %v1026 = vsub.f32 %v50, %v946
  %v1027 = vsub.f32 %v51, %v950
  %v1028 = vsub.f32 %v52, %v954
  %v1029 = vmax.f32 %v1025, 0.0
  %v1030 = vmax.f32 %v1026, 0.0
  %v1031 = vmax.f32 %v1027, 0.0
  %v1032 = vmax.f32 %v1028, 0.0
  %v1033 = vsub.f32 %v942, %v53
  %v1034 = vsub.f32 %v946, %v54
  %v1035 = vsub.f32 %v950, %v55
  %v1036 = vsub.f32 %v954, %v56
  %v1037 = vmax.f32 %v1033, 0.0
  %v1038 = vmax.f32 %v1034, 0.0
  %v1039 = vmax.f32 %v1035, 0.0
  %v1040 = vmax.f32 %v1036, 0.0
  %v1041 = vmin.f32 %v1029, %v1037
  %v1042 = vmin.f32 %v1030, %v1038
  %v1043 = vmin.f32 %v1031, %v1039
  %v1044 = vmin.f32 %v1032, %v1040
  %v1045 = vmul.f32 %v1041, %v1041
  %v1046 = vmul.f32 %v1042, %v1042
  %v1047 = vmul.f32 %v1043, %v1043
  %v1048 = vmul.f32 %v1044, %v1044
  %v1049 = vadd.f32 %v1045, %v1046
  %v1050 = vadd.f32 %v1049, %v1047
  %v1051 = vadd.f32 %v1050, %v1048
  %v1052 = vrot.slane %v1051, 4
  %v1053 = vadd.f32 %v1051, %v1052
  %v1054 = vrot.slane %v1053, 2
  %v1055 = vadd.f32 %v1053, %v1054
  %v1056 = vrot.slane %v1055, 1
  %v1057 = vadd.f32 %v1055, %v1056
  %v1058 = vrsqrt.pop %v1057
  %v1059 = vmul.f32 %v1057, %v1058
  %vm1060 = vcmp.eq.f32.partialorder %v1057, inf
  %v1061 = vsel %vm1060, %v1057, %v1059
  %vm1062 = vcmp.eq.f32.partialorder %v1057, 0.0
  %v1063 = vand.u32 %v1057, 2147483648
  %v1064 = vsel %vm1062, %v1063, %v1061
  %vm1065 = vcmask 1040384
  %v1066 = vsel %vm1065, %v109, %v234
  %vm1067 = vcmask 1041408
  %v1068 = vsel %vm1067, %v1066, %v359
  %vm1069 = vcmask 1042432
  %v1070 = vsel %vm1069, %v1068, %v484
  %vm1071 = vcmask 1043456
  %v1072 = vsel %vm1071, %v1070, %v609
  %vm1073 = vcmask 1044480
  %v1074 = vsel %vm1073, %v1072, %v734
  %vm1075 = vcmask 1045504
  %v1076 = vsel %vm1075, %v1074, %v859
  %vm1077 = vcmask 1046528
  %v1078 = vsel %vm1077, %v1076, %v984
  %v1079 = vsel %vm1065, %v189, %v314
  %v1080 = vsel %vm1067, %v1079, %v439
  %v1081 = vsel %vm1069, %v1080, %v564
  %v1082 = vsel %vm1071, %v1081, %v689
  %v1083 = vsel %vm1073, %v1082, %v814
  %v1084 = vsel %vm1075, %v1083, %v939
  %v1085 = vsel %vm1077, %v1084, %v1064
  %v1086 = vsel %vm1065, %v149, %v274
  %v1087 = vsel %vm1067, %v1086, %v399
  %v1088 = vsel %vm1069, %v1087, %v524
  %v1089 = vsel %vm1071, %v1088, %v649
  %v1090 = vsel %vm1073, %v1089, %v774
  %v1091 = vsel %vm1075, %v1090, %v899
  %v1092 = vsel %vm1077, %v1091, %v1024
  %1093 = vst [vmem:[%s3] sm:$0xff] %v1085
  %s1094 = scalar_lea.vmem %s3, 8
  %1095 = vst [vmem:[%s1094] sm:$0xff] %v1092
  %v1096 = vld [vmem:[%s2] sm:$0xff]
  %v1097 = vld [vmem:[%s2 + $0x8] sm:$0xff]
  %v1098 = vld [vmem:[%s2 + $0x10] sm:$0xff]
  %v1099 = vld [vmem:[%s2 + $0x18] sm:$0xff]
  %v1100 = vld [vmem:[%s2 + $0x20] sm:$0xff]
  %v1101 = vld [vmem:[%s2 + $0x28] sm:$0xff]
  %v1102 = vld [vmem:[%s2 + $0x30] sm:$0xff]
  %v1103 = vld [vmem:[%s2 + $0x38] sm:$0xff]
  %v1104 = vld [vmem:[%s2 + $0x40] sm:$0xff]
  %v1105 = vld [vmem:[%s2 + $0x48] sm:$0xff]
  %v1106 = vld [vmem:[%s2 + $0x50] sm:$0xff]
  %v1107 = vld [vmem:[%s2 + $0x58] sm:$0xff]
  %v1108 = vld [vmem:[%s2 + $0x60] sm:$0xff]
  %v1109 = vld [vmem:[%s2 + $0x68] sm:$0xff]
  %v1110 = vld [vmem:[%s2 + $0x70] sm:$0xff]
  %v1111 = vld [vmem:[%s2 + $0x78] sm:$0xff]
  %1112 = vmatprep.subr.mxu0 0.0
  %1113 = vmatpush1.msra.mxu0 %v1096
  %1114 = vmatprep.subr.mxu0 0.0
  %1115 = vmatpush1.msra.mxu0 %v1097
  %1116 = vmatprep.subr.mxu0 0.0
  %1117 = vmatpush1.msra.mxu0 %v1098
  %1118 = vmatprep.subr.mxu0 0.0
  %1119 = vmatpush1.msra.mxu0 %v1099
  %1120 = vmatprep.subr.mxu0 0.0
  %1121 = vmatpush1.msra.mxu0 %v1100
  %1122 = vmatprep.subr.mxu0 0.0
  %1123 = vmatpush1.msra.mxu0 %v1101
  %1124 = vmatprep.subr.mxu0 0.0
  %1125 = vmatpush1.msra.mxu0 %v1102
  %1126 = vmatprep.subr.mxu0 0.0
  %1127 = vmatpush1.msra.mxu0 %v1103
  %1128 = vmatprep.subr.mxu0 0.0
  %1129 = vmatpush1.msra.mxu0 %v1104
  %1130 = vmatprep.subr.mxu0 0.0
  %1131 = vmatpush1.msra.mxu0 %v1105
  %1132 = vmatprep.subr.mxu0 0.0
  %1133 = vmatpush1.msra.mxu0 %v1106
  %1134 = vmatprep.subr.mxu0 0.0
  %1135 = vmatpush1.msra.mxu0 %v1107
  %1136 = vmatprep.subr.mxu0 0.0
  %1137 = vmatpush1.msra.mxu0 %v1108
  %1138 = vmatprep.subr.mxu0 0.0
  %1139 = vmatpush1.msra.mxu0 %v1109
  %1140 = vmatprep.subr.mxu0 0.0
  %1141 = vmatpush1.msra.mxu0 %v1110
  %1142 = vmatprep.subr.mxu0 0.0
  %1143 = vmatpush1.msra.mxu0 %v1111
  %1144 = vmatprep.subr.mxu0 0.0
  %1145 = vmatpush1.msra.mxu0 0.0
  %1146 = vmatprep.subr.mxu0 0.0
  %1147 = vmatpush1.msra.mxu0 0.0
  %1148 = vmatprep.subr.mxu0 0.0
  %1149 = vmatpush1.msra.mxu0 0.0
  %1150 = vmatprep.subr.mxu0 0.0
  %1151 = vmatpush1.msra.mxu0 0.0
  %1152 = vmatprep.subr.mxu0 0.0
  %1153 = vmatpush1.msra.mxu0 0.0
  %1154 = vmatprep.subr.mxu0 0.0
  %1155 = vmatpush1.msra.mxu0 0.0
  %1156 = vmatprep.subr.mxu0 0.0
  %1157 = vmatpush1.msra.mxu0 0.0
  %1158 = vmatprep.subr.mxu0 0.0
  %1159 = vmatpush1.msra.mxu0 0.0
  %1160 = vmatprep.subr.mxu0 0.0
  %1161 = vmatpush1.msra.mxu0 0.0
  %1162 = vmatprep.subr.mxu0 0.0
  %1163 = vmatpush1.msra.mxu0 0.0
  %1164 = vmatprep.subr.mxu0 0.0
  %1165 = vmatpush1.msra.mxu0 0.0
  %1166 = vmatprep.subr.mxu0 0.0
  %1167 = vmatpush1.msra.mxu0 0.0
  %1168 = vmatprep.subr.mxu0 0.0
  %1169 = vmatpush1.msra.mxu0 0.0
  %1170 = vmatprep.subr.mxu0 0.0
  %1171 = vmatpush1.msra.mxu0 0.0
  %1172 = vmatprep.subr.mxu0 0.0
  %1173 = vmatpush1.msra.mxu0 0.0
  %1174 = vmatprep.subr.mxu0 0.0
  %1175 = vmatpush1.msra.mxu0 0.0
  %1176 = vmatprep.mubr.f32.mxu0 0.0
  %1177 = vmatmul.mubr.f32.gmra.mrb[0].mxu0 %v1078
  %v1178 = vpop.f32.mrb[0].mxu0
  %v1179 = vadd.f32 0.0, %v1178
  %v1180 = vpop.f32.mrb[0].mxu0
  %1181 = vdwg.mxu0
  %v1182 = vmin.f32 %v1179, 1.0
  %v1183 = vsub.f32 1.0, %v1182
  %v1184 = vmul.f32 %v1078, %v1183
  %v1185 = vcvt.f32.s32.to.zero.pseudo %v1078
  %1186 = vst [vmem:[%s4] sm:$0xff] %v1185
  %v1187 = vcvt.f32.s32.to.zero.pseudo %v1184
  %s1188 = scalar_lea.vmem %s4, 8
  %1189 = vst [vmem:[%s1188] sm:$0xff] %v1187
  // Predicated region
  $region14: #{geometry_net_forward.1} parent=0 // pred_check
    _
  $region15: #{geometry_net_forward.1} parent=0 // pred_check_branch
    %1191 = sbr.rel (0) target = $region17
  $region16: #{geometry_net_forward.1} parent=0 // pred_region
    _
  $region17: #{geometry_net_forward.1} parent=0 // pred_fallthru
    _
  // Predicated region
  $region18: #{geometry_net_forward.1} parent=0 // pred_check
    _
  $region19: #{geometry_net_forward.1} parent=0 // pred_check_branch
    %1193 = sbr.rel (0) target = $region21
  $region20: #{geometry_net_forward.1} parent=0 // pred_region
    _
  $region21: #{geometry_net_forward.1} parent=0 // pred_fallthru
    _
  // Predicated region
  $region22: #{geometry_net_forward.1} parent=0 // pred_check
    _
  $region23: #{geometry_net_forward.1} parent=0 // pred_check_branch
    %1195 = sbr.rel (0) target = $region25
  $region24: #{geometry_net_forward.1} parent=0 // pred_region
    _
  $region25: #{geometry_net_forward.1} parent=0 // pred_fallthru
    _
  // Predicated region
  $region26: #{geometry_net_forward.1} parent=0 // pred_check
    _
  $region27: #{geometry_net_forward.1} parent=0 // pred_check_branch
    %1197 = sbr.rel (0) target = $region29
  $region28: #{geometry_net_forward.1} parent=0 // pred_region
    _
  $region29: #{geometry_net_forward.1} parent=0 // pred_fallthru
    _

</llo_original>
